<compile_context>
chip_gen: v6e
topology: v6e:2x2x1
jax: 0.10.0
libtpu: 0.0.40
codegen_flags: <defaults>
</compile_context>

<pallas_src>
import functools
import math

import jax
import jax.numpy as jnp
from jax.experimental import pallas as pl
from jax.experimental.pallas import tpu as pltpu


def _layer_norm(x, w, b, eps=1e-5):
    # x: (N, D), w/b: (1, D); all f32.
    mu = jnp.mean(x, axis=-1, keepdims=True)
    var = jnp.mean((x - mu) ** 2, axis=-1, keepdims=True)
    return (x - mu) * jax.lax.rsqrt(var + eps) * w + b


def transformer_kernel(
    x_ref,        # (S, D)        f32   one batch element (batch dim squeezed by grid)
    attn_w_ref,   # (L, 3, D, D)  bf16  [Wq*scale, Wk, Wv@Wo]
    vecs_ref,     # (L, 8, D)     f32   [bq*scale, bk, bv@Wo+bo, n1_w, n1_b, n2_w, n2_b, l2_b]
    l1_wt_ref,    # (L, D, H)     bf16
    l1_b_ref,     # (L, 1, H)     f32
    l2_wt_ref,    # (L, H, D)     bf16
    fc_wt_ref,    # (D, O_pad)    bf16  zero-padded to a 128-lane multiple
    fc_b_ref,     # (1, O_pad)    f32
    o_ref,        # (S, O_pad)    f32
    *,
    num_layers: int,
    seq_len: int,
):
    x = x_ref[...]                                                 # (S, D) f32

    # Causal mask: torch.triu(ones, diagonal=1) masks key pos > query pos.
    row = jax.lax.broadcasted_iota(jnp.int32, (seq_len, seq_len), 0)
    col = jax.lax.broadcasted_iota(jnp.int32, (seq_len, seq_len), 1)
    mask_bias = jnp.where(col <= row, jnp.float32(0.0), jnp.float32(-1e30))

    for layer in range(num_layers):                                # static unroll (2 layers)
        x16 = x.astype(jnp.bfloat16)

        bq = vecs_ref[layer, 0:1, :]
        bk = vecs_ref[layer, 1:2, :]
        bvo = vecs_ref[layer, 2:3, :]

        # q already carries the 1/sqrt(D) scale (folded into Wq / bq offline).
        q = jnp.dot(x16, attn_w_ref[layer, 0, :, :],
                    preferred_element_type=jnp.float32) + bq
        k = jnp.dot(x16, attn_w_ref[layer, 1, :, :],
                    preferred_element_type=jnp.float32) + bk
        # Folded V / out-proj: vo = x @ (Wv @ Wo); folded bias bvo added after p @ vo.
        vo = jnp.dot(x16, attn_w_ref[layer, 2, :, :],
                     preferred_element_type=jnp.float32)

        scores = jax.lax.dot_general(
            q.astype(jnp.bfloat16), k.astype(jnp.bfloat16),
            (((1,), (1,)), ((), ())),
            preferred_element_type=jnp.float32) + mask_bias        # (S, S) f32
        scores = scores - jnp.max(scores, axis=-1, keepdims=True)
        p = jnp.exp(scores)
        # Exact normalization: rows sum to 1, which the Wv@Wo bias folding relies on.
        p = p / jnp.sum(p, axis=-1, keepdims=True)

        attn = jnp.dot(p.astype(jnp.bfloat16), vo.astype(jnp.bfloat16),
                       preferred_element_type=jnp.float32) + bvo

        x = _layer_norm(x + attn, vecs_ref[layer, 3:4, :], vecs_ref[layer, 4:5, :])

        # Feed-forward: Linear -> ReLU -> Linear.
        h = jnp.maximum(
            jnp.dot(x.astype(jnp.bfloat16), l1_wt_ref[layer],
                    preferred_element_type=jnp.float32) + l1_b_ref[layer], 0.0)
        ff = (jnp.dot(h.astype(jnp.bfloat16), l2_wt_ref[layer],
                      preferred_element_type=jnp.float32) + vecs_ref[layer, 7:8, :])

        x = _layer_norm(x + ff, vecs_ref[layer, 5:6, :], vecs_ref[layer, 6:7, :])

    # Final fc, lane-dense (O padded to 128) store.
    o_ref[...] = (jnp.dot(x.astype(jnp.bfloat16), fc_wt_ref[...],
                          preferred_element_type=jnp.float32) + fc_b_ref[...])


def _const_spec(shape):
    nd = len(shape)
    return pl.BlockSpec(shape, lambda b, _nd=nd: (0,) * _nd)


def transformer_forward(tokens, emb, pos, kp, *, seq_len, d_model, num_layers, out_dim):
    """Embedding lookup + positional add (XLA glue) and one pallas_call gridded over batch."""
    x = emb[tokens] + pos[None, :seq_len, :]                       # (B, S, D) f32
    batch = x.shape[0]
    o_pad = kp["fc_wt"].shape[1]

    weight_args = (kp["attn_w"], kp["vecs"], kp["l1_wt"], kp["l1_b"],
                   kp["l2_wt"], kp["fc_wt"], kp["fc_b"])

    kernel = functools.partial(transformer_kernel,
                               num_layers=num_layers, seq_len=seq_len)

    out = pl.pallas_call(
        kernel,
        out_shape=jax.ShapeDtypeStruct((batch, seq_len, o_pad), jnp.float32),
        grid=(batch,),
        in_specs=[pl.BlockSpec((None, seq_len, d_model), lambda b: (b, 0, 0))]
                 + [_const_spec(w.shape) for w in weight_args],
        out_specs=pl.BlockSpec((None, seq_len, o_pad), lambda b: (b, 0, 0)),
        compiler_params=pltpu.CompilerParams(dimension_semantics=("parallel",)),
    )(x, *weight_args)

    return out[:, :, :out_dim]


def pack_params(params, *, d_model, out_dim):
    """One-time offline folding / packing of the raw f32 parameters for the kernel."""
    D = d_model
    scale = 1.0 / math.sqrt(D)                                     # nhead=1 -> head_dim = D

    wq_s = params["wq"] * scale                                    # (L, D, D)
    bq_s = params["bq"] * scale                                    # (L, 1, D)
    wvo = jnp.einsum("lij,ljk->lik", params["wv"], params["wo"])   # (L, D, D)
    bvo = jnp.einsum("lij,ljk->lik", params["bv"], params["wo"]) + params["bo"]  # (L, 1, D)

    attn_w = jnp.stack([wq_s, params["wk"], wvo], axis=1).astype(jnp.bfloat16)   # (L, 3, D, D)
    vecs = jnp.concatenate(
        [bq_s, params["bk"], bvo,
         params["n1_w"], params["n1_b"], params["n2_w"], params["n2_b"],
         params["l2_b"]], axis=1).astype(jnp.float32)                            # (L, 8, D)

    o_pad = ((out_dim + 127) // 128) * 128
    fc_wt = jnp.zeros((D, o_pad), jnp.float32).at[:, :out_dim].set(params["fc_wt"])
    fc_b = jnp.zeros((1, o_pad), jnp.float32).at[:, :out_dim].set(params["fc_b"])

    return dict(
        attn_w=attn_w,
        vecs=vecs,
        l1_wt=params["l1_wt"].astype(jnp.bfloat16),
        l1_b=params["l1_b"].astype(jnp.float32),
        l2_wt=params["l2_wt"].astype(jnp.bfloat16),
        fc_wt=fc_wt.astype(jnp.bfloat16),
        fc_b=fc_b,
    )


def reference_forward(tokens, params, *, seq_len, d_model, num_layers):
    # Pure-JAX f32 reference implementing the same math (eval-mode PyTorch encoder).
    x = params["emb"][tokens] + params["pos"][None, :seq_len, :]
    row = jnp.arange(seq_len)[:, None]
    col = jnp.arange(seq_len)[None, :]
    bias = jnp.where(col > row, -1e30, 0.0).astype(jnp.float32)
    scale = 1.0 / jnp.sqrt(jnp.float32(d_model))

    def ln(x, w, b, eps=1e-5):
        mu = jnp.mean(x, axis=-1, keepdims=True)
        var = jnp.mean((x - mu) ** 2, axis=-1, keepdims=True)
        return (x - mu) / jnp.sqrt(var + eps) * w + b

    for l in range(num_layers):
        q = x @ params["wq"][l] + params["bq"][l]
        k = x @ params["wk"][l] + params["bk"][l]
        v = x @ params["wv"][l] + params["bv"][l]
        s = jnp.einsum("bqd,bkd->bqk", q, k) * scale + bias
        p = jax.nn.softmax(s, axis=-1)
        attn = jnp.einsum("bqk,bkd->bqd", p, v) @ params["wo"][l] + params["bo"][l]
        x = ln(x + attn, params["n1_w"][l], params["n1_b"][l])
        h = jax.nn.relu(x @ params["l1_wt"][l] + params["l1_b"][l])
        ff = h @ params["l2_wt"][l] + params["l2_b"][l]
        x = ln(x + ff, params["n2_w"][l], params["n2_b"][l])
    return x @ params["fc_wt"] + params["fc_b"]


def make_params(key, *, vocab, d_model, hidden, out_dim, num_layers, max_seq_len):
    ks = iter(jax.random.split(key, 64))
    D, H = d_model, hidden

    def xavier(k, shape):  # shape = (fan_out, fan_in), PyTorch convention
        fan_out, fan_in = shape
        lim = (6.0 / (fan_in + fan_out)) ** 0.5
        return jax.random.uniform(k, shape, jnp.float32, -lim, lim)

    # Embedding (padding_idx=0 -> zero row), nn.Embedding init uniform(-0.1, 0.1).
    emb = jax.random.uniform(next(ks), (vocab, D), jnp.float32, -0.1, 0.1)
    emb = emb.at[0].set(0.0)
    pos = 0.02 * jax.random.normal(next(ks), (max_seq_len, D), jnp.float32)

    def stack(fn):
        return jnp.stack([fn() for _ in range(num_layers)], axis=0)

    # Combined in_proj per layer (PyTorch (3D, D) layout), split + transposed so
    # the kernel/reference compute x @ Wq^T etc. with lane-contiguous (D, D) weights.
    in_w = stack(lambda: xavier(next(ks), (3 * D, D)))                        # (L, 3D, D)
    in_b = stack(lambda: 0.01 * jax.random.normal(next(ks), (3 * D,)))        # (L, 3D)
    wq = jnp.transpose(in_w[:, 0:D, :], (0, 2, 1))                            # (L, D, D)
    wk = jnp.transpose(in_w[:, D:2 * D, :], (0, 2, 1))
    wv = jnp.transpose(in_w[:, 2 * D:, :], (0, 2, 1))
    bq = in_b[:, None, 0:D]                                                   # (L, 1, D)
    bk = in_b[:, None, D:2 * D]
    bv = in_b[:, None, 2 * D:]

    wo = jnp.transpose(stack(lambda: xavier(next(ks), (D, D))), (0, 2, 1))    # (L, D, D)
    bo = stack(lambda: 0.01 * jax.random.normal(next(ks), (1, D)))

    n1_w = jnp.ones((num_layers, 1, D), jnp.float32)
    n1_b = jnp.zeros((num_layers, 1, D), jnp.float32)
    n2_w = jnp.ones((num_layers, 1, D), jnp.float32)
    n2_b = jnp.zeros((num_layers, 1, D), jnp.float32)

    l1_wt = jnp.transpose(stack(lambda: xavier(next(ks), (H, D))), (0, 2, 1))  # (L, D, H)
    l1_b = stack(lambda: 0.01 * jax.random.normal(next(ks), (1, H)))
    l2_wt = jnp.transpose(stack(lambda: xavier(next(ks), (D, H))), (0, 2, 1))  # (L, H, D)
    l2_b = stack(lambda: 0.01 * jax.random.normal(next(ks), (1, D)))

    fc_wt = xavier(next(ks), (out_dim, D)).T                                   # (D, O)
    fc_b = jnp.zeros((1, out_dim), jnp.float32)

    return dict(emb=emb, pos=pos,
                wq=wq, bq=bq, wk=wk, bk=bk, wv=wv, bv=bv, wo=wo, bo=bo,
                n1_w=n1_w, n1_b=n1_b, n2_w=n2_w, n2_b=n2_b,
                l1_wt=l1_wt, l1_b=l1_b, l2_wt=l2_wt, l2_b=l2_b,
                fc_wt=fc_wt, fc_b=fc_b)


if __name__ == "__main__":
    B, S = 2, 8                  # batch, seq_len
    V, D, H, O = 12, 32, 64, 16  # vocab_size, embedding_dim, hidden_dim, output_dim
    L = 2                        # num transformer encoder layers
    MAX_SEQ = 16

    key = jax.random.PRNGKey(0)
    k_tok, k_par = jax.random.split(key)
    tokens = jax.random.randint(k_tok, (B, S), 0, V, dtype=jnp.int32)
    params = make_params(k_par, vocab=V, d_model=D, hidden=H, out_dim=O,
                         num_layers=L, max_seq_len=MAX_SEQ)
    kp = pack_params(params, d_model=D, out_dim=O)   # one-time offline folding/packing

    fwd = jax.jit(functools.partial(transformer_forward, seq_len=S, d_model=D,
                                    num_layers=L, out_dim=O))
    out = jax.block_until_ready(fwd(tokens, params["emb"], params["pos"], kp))

    ref = reference_forward(tokens, params, seq_len=S, d_model=D, num_layers=L)
    assert out.shape == (B, S, O)
    # The kernel stores weights in bf16 and feeds bf16 MXU inputs (f32 accumulation),
    # while the reference is pure f32; the tolerance covers that quantization
    # (~0.2-0.4% relative per dot), not any algorithmic difference.
    assert jnp.allclose(out, ref, atol=5e-2, rtol=5e-2), "mismatch vs JAX reference"

    print("KERNEL_OK")
</pallas_src>

<mosaic_0001>
module attributes {stable_mosaic.version = 11 : i64} {
  func.func @transformer_kernel(%arg0: i32, %arg1: memref<1x8x32xf32, #tpu.memory_space<vmem>>, %arg2: memref<2x3x32x32xbf16, #tpu.memory_space<vmem>>, %arg3: memref<2x8x32xf32, #tpu.memory_space<vmem>>, %arg4: memref<2x32x64xbf16, #tpu.memory_space<vmem>>, %arg5: memref<2x1x64xf32, #tpu.memory_space<vmem>>, %arg6: memref<2x64x32xbf16, #tpu.memory_space<vmem>>, %arg7: memref<32x128xbf16, #tpu.memory_space<vmem>>, %arg8: memref<1x128xf32, #tpu.memory_space<vmem>>, %arg9: memref<1x8x128xf32, #tpu.memory_space<vmem>>) attributes {dimension_semantics = [#tpu.dimension_semantics<parallel>], iteration_bounds = array<i64: 2>, scalar_prefetch = 0 : i64, scratch_operands = 0 : i64, tpu.core_type = #tpu.core_type<tc>, window_params = [{transform_indices = @transform_0, window_bounds = array<i64: 1, 8, 32>}, {pipeline_mode = #tpu.pipeline_mode<synchronous>, transform_indices = @transform_1, window_bounds = array<i64: 2, 3, 32, 32>}, {pipeline_mode = #tpu.pipeline_mode<synchronous>, transform_indices = @transform_2, window_bounds = array<i64: 2, 8, 32>}, {pipeline_mode = #tpu.pipeline_mode<synchronous>, transform_indices = @transform_3, window_bounds = array<i64: 2, 32, 64>}, {pipeline_mode = #tpu.pipeline_mode<synchronous>, transform_indices = @transform_4, window_bounds = array<i64: 2, 1, 64>}, {pipeline_mode = #tpu.pipeline_mode<synchronous>, transform_indices = @transform_5, window_bounds = array<i64: 2, 64, 32>}, {pipeline_mode = #tpu.pipeline_mode<synchronous>, transform_indices = @transform_6, window_bounds = array<i64: 32, 128>}, {pipeline_mode = #tpu.pipeline_mode<synchronous>, transform_indices = @transform_7, window_bounds = array<i64: 1, 128>}, {transform_indices = @transform_8, window_bounds = array<i64: 1, 8, 128>}]} {
    %c0 = arith.constant 0 : index
    %c0_0 = arith.constant 0 : index
    %c0_1 = arith.constant 0 : index
    %0 = vector.load %arg1[%c0, %c0_0, %c0_1] : memref<1x8x32xf32, #tpu.memory_space<vmem>>, vector<1x8x32xf32>
    %1 = vector.shape_cast %0 : vector<1x8x32xf32> to vector<8x32xf32>
    %2 = tpu.iota {dimensions = array<i32: 0>} : vector<8x8xi32>
    %3 = tpu.iota {dimensions = array<i32: 1>} : vector<8x8xi32>
    %4 = arith.cmpi sle, %3, %2 : vector<8x8xi32>
    %cst = arith.constant 0.000000e+00 : f32
    %cst_2 = arith.constant -1.000000e+30 : f32
    %5 = vector.broadcast %cst : f32 to vector<8x8xf32>
    %6 = vector.broadcast %cst_2 : f32 to vector<8x8xf32>
    %7 = arith.select %4, %5, %6 : vector<8x8xi1>, vector<8x8xf32>
    %8 = arith.truncf %1 : vector<8x32xf32> to vector<8x32xbf16>
    %c0_3 = arith.constant 0 : index
    %c0_4 = arith.constant 0 : index
    %c0_5 = arith.constant 0 : index
    %9 = vector.load %arg3[%c0_3, %c0_4, %c0_5] : memref<2x8x32xf32, #tpu.memory_space<vmem>>, vector<1x1x32xf32>
    %10 = vector.shape_cast %9 : vector<1x1x32xf32> to vector<1x32xf32>
    %c0_6 = arith.constant 0 : index
    %c1 = arith.constant 1 : index
    %c0_7 = arith.constant 0 : index
    %11 = vector.load %arg3[%c0_6, %c1, %c0_7] : memref<2x8x32xf32, #tpu.memory_space<vmem>>, vector<1x1x32xf32>
    %12 = vector.shape_cast %11 : vector<1x1x32xf32> to vector<1x32xf32>
    %c0_8 = arith.constant 0 : index
    %c2 = arith.constant 2 : index
    %c0_9 = arith.constant 0 : index
    %13 = vector.load %arg3[%c0_8, %c2, %c0_9] : memref<2x8x32xf32, #tpu.memory_space<vmem>>, vector<1x1x32xf32>
    %14 = vector.shape_cast %13 : vector<1x1x32xf32> to vector<1x32xf32>
    %c0_10 = arith.constant 0 : index
    %c0_11 = arith.constant 0 : index
    %c0_12 = arith.constant 0 : index
    %c0_13 = arith.constant 0 : index
    %15 = vector.load %arg2[%c0_10, %c0_11, %c0_12, %c0_13] : memref<2x3x32x32xbf16, #tpu.memory_space<vmem>>, vector<1x1x32x32xbf16>
    %16 = vector.shape_cast %15 : vector<1x1x32x32xbf16> to vector<32x32xbf16>
    %cst_14 = arith.constant dense<0.000000e+00> : vector<8x32xf32>
    %17 = tpu.matmul %8, %16, %cst_14 {dimension_numbers = #tpu.dot_dimension_numbers<[1], [0], [0], [1], [0, 0, 1, 1], [], []>} : vector<8x32xbf16>, vector<32x32xbf16>, vector<8x32xf32> -> vector<8x32xf32>
    %18 = vector.broadcast %10 : vector<1x32xf32> to vector<8x32xf32>
    %19 = arith.addf %17, %18 : vector<8x32xf32>
    %c0_15 = arith.constant 0 : index
    %c1_16 = arith.constant 1 : index
    %c0_17 = arith.constant 0 : index
    %c0_18 = arith.constant 0 : index
    %20 = vector.load %arg2[%c0_15, %c1_16, %c0_17, %c0_18] : memref<2x3x32x32xbf16, #tpu.memory_space<vmem>>, vector<1x1x32x32xbf16>
    %21 = vector.shape_cast %20 : vector<1x1x32x32xbf16> to vector<32x32xbf16>
    %cst_19 = arith.constant dense<0.000000e+00> : vector<8x32xf32>
    %22 = tpu.matmul %8, %21, %cst_19 {dimension_numbers = #tpu.dot_dimension_numbers<[1], [0], [0], [1], [0, 0, 1, 1], [], []>} : vector<8x32xbf16>, vector<32x32xbf16>, vector<8x32xf32> -> vector<8x32xf32>
    %23 = vector.broadcast %12 : vector<1x32xf32> to vector<8x32xf32>
    %24 = arith.addf %22, %23 : vector<8x32xf32>
    %c0_20 = arith.constant 0 : index
    %c2_21 = arith.constant 2 : index
    %c0_22 = arith.constant 0 : index
    %c0_23 = arith.constant 0 : index
    %25 = vector.load %arg2[%c0_20, %c2_21, %c0_22, %c0_23] : memref<2x3x32x32xbf16, #tpu.memory_space<vmem>>, vector<1x1x32x32xbf16>
    %26 = vector.shape_cast %25 : vector<1x1x32x32xbf16> to vector<32x32xbf16>
    %cst_24 = arith.constant dense<0.000000e+00> : vector<8x32xf32>
    %27 = tpu.matmul %8, %26, %cst_24 {dimension_numbers = #tpu.dot_dimension_numbers<[1], [0], [0], [1], [0, 0, 1, 1], [], []>} : vector<8x32xbf16>, vector<32x32xbf16>, vector<8x32xf32> -> vector<8x32xf32>
    %28 = arith.truncf %19 : vector<8x32xf32> to vector<8x32xbf16>
    %29 = arith.truncf %24 : vector<8x32xf32> to vector<8x32xbf16>
    %cst_25 = arith.constant dense<0.000000e+00> : vector<8x8xf32>
    %30 = tpu.matmul %28, %29, %cst_25 {dimension_numbers = #tpu.dot_dimension_numbers<[1], [1], [0], [0], [0, 0, 1, 0], [], []>} : vector<8x32xbf16>, vector<8x32xbf16>, vector<8x8xf32> -> vector<8x8xf32>
    %31 = arith.addf %30, %7 : vector<8x8xf32>
    %cst_26 = arith.constant dense<0xFF800000> : vector<8xf32>
    %32 = vector.multi_reduction <maximumf>, %31, %cst_26 [1] : vector<8x8xf32> to vector<8xf32>
    %33 = vector.shape_cast %32 : vector<8xf32> to vector<8x1xf32>
    %34 = vector.broadcast %33 : vector<8x1xf32> to vector<8x8xf32>
    %35 = arith.subf %31, %34 : vector<8x8xf32>
    %36 = math.exp %35 : vector<8x8xf32>
    %cst_27 = arith.constant dense<0.000000e+00> : vector<8xf32>
    %37 = vector.multi_reduction <add>, %36, %cst_27 [1] : vector<8x8xf32> to vector<8xf32>
    %38 = vector.shape_cast %37 : vector<8xf32> to vector<8x1xf32>
    %39 = vector.broadcast %38 : vector<8x1xf32> to vector<8x8xf32>
    %40 = arith.divf %36, %39 : vector<8x8xf32>
    %41 = arith.truncf %40 : vector<8x8xf32> to vector<8x8xbf16>
    %42 = arith.truncf %27 : vector<8x32xf32> to vector<8x32xbf16>
    %cst_28 = arith.constant dense<0.000000e+00> : vector<8x32xf32>
    %43 = tpu.matmul %41, %42, %cst_28 {dimension_numbers = #tpu.dot_dimension_numbers<[1], [0], [0], [1], [0, 0, 1, 1], [], []>} : vector<8x8xbf16>, vector<8x32xbf16>, vector<8x32xf32> -> vector<8x32xf32>
    %44 = vector.broadcast %14 : vector<1x32xf32> to vector<8x32xf32>
    %45 = arith.addf %43, %44 : vector<8x32xf32>
    %46 = arith.addf %1, %45 : vector<8x32xf32>
    %c0_29 = arith.constant 0 : index
    %c3 = arith.constant 3 : index
    %c0_30 = arith.constant 0 : index
    %47 = vector.load %arg3[%c0_29, %c3, %c0_30] : memref<2x8x32xf32, #tpu.memory_space<vmem>>, vector<1x1x32xf32>
    %48 = vector.shape_cast %47 : vector<1x1x32xf32> to vector<1x32xf32>
    %c0_31 = arith.constant 0 : index
    %c4 = arith.constant 4 : index
    %c0_32 = arith.constant 0 : index
    %49 = vector.load %arg3[%c0_31, %c4, %c0_32] : memref<2x8x32xf32, #tpu.memory_space<vmem>>, vector<1x1x32xf32>
    %50 = vector.shape_cast %49 : vector<1x1x32xf32> to vector<1x32xf32>
    %cst_33 = arith.constant dense<0.000000e+00> : vector<8xf32>
    %51 = vector.multi_reduction <add>, %46, %cst_33 [1] : vector<8x32xf32> to vector<8xf32>
    %52 = vector.shape_cast %51 : vector<8xf32> to vector<8x1xf32>
    %cst_34 = arith.constant 3.200000e+01 : f32
    %53 = vector.broadcast %cst_34 : f32 to vector<8x1xf32>
    %54 = arith.divf %52, %53 : vector<8x1xf32>
    %55 = vector.broadcast %54 : vector<8x1xf32> to vector<8x32xf32>
    %56 = arith.subf %46, %55 : vector<8x32xf32>
    %57 = arith.mulf %56, %56 : vector<8x32xf32>
    %cst_35 = arith.constant dense<0.000000e+00> : vector<8xf32>
    %58 = vector.multi_reduction <add>, %57, %cst_35 [1] : vector<8x32xf32> to vector<8xf32>
    %59 = vector.shape_cast %58 : vector<8xf32> to vector<8x1xf32>
    %cst_36 = arith.constant 3.200000e+01 : f32
    %60 = vector.broadcast %cst_36 : f32 to vector<8x1xf32>
    %61 = arith.divf %59, %60 : vector<8x1xf32>
    %62 = vector.broadcast %54 : vector<8x1xf32> to vector<8x32xf32>
    %63 = arith.subf %46, %62 : vector<8x32xf32>
    %cst_37 = arith.constant 9.99999974E-6 : f32
    %64 = vector.broadcast %cst_37 : f32 to vector<8x1xf32>
    %65 = arith.addf %61, %64 : vector<8x1xf32>
    %66 = math.rsqrt %65 : vector<8x1xf32>
    %67 = vector.broadcast %66 : vector<8x1xf32> to vector<8x32xf32>
    %68 = arith.mulf %63, %67 : vector<8x32xf32>
    %69 = vector.broadcast %48 : vector<1x32xf32> to vector<8x32xf32>
    %70 = arith.mulf %68, %69 : vector<8x32xf32>
    %71 = vector.broadcast %50 : vector<1x32xf32> to vector<8x32xf32>
    %72 = arith.addf %70, %71 : vector<8x32xf32>
    %73 = arith.truncf %72 : vector<8x32xf32> to vector<8x32xbf16>
    %c0_38 = arith.constant 0 : index
    %c0_39 = arith.constant 0 : index
    %c0_40 = arith.constant 0 : index
    %74 = vector.load %arg4[%c0_38, %c0_39, %c0_40] : memref<2x32x64xbf16, #tpu.memory_space<vmem>>, vector<1x32x64xbf16>
    %75 = vector.shape_cast %74 : vector<1x32x64xbf16> to vector<32x64xbf16>
    %cst_41 = arith.constant dense<0.000000e+00> : vector<8x64xf32>
    %76 = tpu.matmul %73, %75, %cst_41 {dimension_numbers = #tpu.dot_dimension_numbers<[1], [0], [0], [1], [0, 0, 1, 1], [], []>} : vector<8x32xbf16>, vector<32x64xbf16>, vector<8x64xf32> -> vector<8x64xf32>
    %c0_42 = arith.constant 0 : index
    %c0_43 = arith.constant 0 : index
    %c0_44 = arith.constant 0 : index
    %77 = vector.load %arg5[%c0_42, %c0_43, %c0_44] : memref<2x1x64xf32, #tpu.memory_space<vmem>>, vector<1x1x64xf32>
    %78 = vector.shape_cast %77 : vector<1x1x64xf32> to vector<1x64xf32>
    %79 = vector.broadcast %78 : vector<1x64xf32> to vector<8x64xf32>
    %80 = arith.addf %76, %79 : vector<8x64xf32>
    %cst_45 = arith.constant 0.000000e+00 : f32
    %81 = vector.broadcast %cst_45 : f32 to vector<8x64xf32>
    %82 = arith.maximumf %80, %81 : vector<8x64xf32>
    %83 = arith.truncf %82 : vector<8x64xf32> to vector<8x64xbf16>
    %c0_46 = arith.constant 0 : index
    %c0_47 = arith.constant 0 : index
    %c0_48 = arith.constant 0 : index
    %84 = vector.load %arg6[%c0_46, %c0_47, %c0_48] : memref<2x64x32xbf16, #tpu.memory_space<vmem>>, vector<1x64x32xbf16>
    %85 = vector.shape_cast %84 : vector<1x64x32xbf16> to vector<64x32xbf16>
    %cst_49 = arith.constant dense<0.000000e+00> : vector<8x32xf32>
    %86 = tpu.matmul %83, %85, %cst_49 {dimension_numbers = #tpu.dot_dimension_numbers<[1], [0], [0], [1], [0, 0, 1, 1], [], []>} : vector<8x64xbf16>, vector<64x32xbf16>, vector<8x32xf32> -> vector<8x32xf32>
    %c0_50 = arith.constant 0 : index
    %c7 = arith.constant 7 : index
    %c0_51 = arith.constant 0 : index
    %87 = vector.load %arg3[%c0_50, %c7, %c0_51] : memref<2x8x32xf32, #tpu.memory_space<vmem>>, vector<1x1x32xf32>
    %88 = vector.shape_cast %87 : vector<1x1x32xf32> to vector<1x32xf32>
    %89 = vector.broadcast %88 : vector<1x32xf32> to vector<8x32xf32>
    %90 = arith.addf %86, %89 : vector<8x32xf32>
    %91 = arith.addf %72, %90 : vector<8x32xf32>
    %c0_52 = arith.constant 0 : index
    %c5 = arith.constant 5 : index
    %c0_53 = arith.constant 0 : index
    %92 = vector.load %arg3[%c0_52, %c5, %c0_53] : memref<2x8x32xf32, #tpu.memory_space<vmem>>, vector<1x1x32xf32>
    %93 = vector.shape_cast %92 : vector<1x1x32xf32> to vector<1x32xf32>
    %c0_54 = arith.constant 0 : index
    %c6 = arith.constant 6 : index
    %c0_55 = arith.constant 0 : index
    %94 = vector.load %arg3[%c0_54, %c6, %c0_55] : memref<2x8x32xf32, #tpu.memory_space<vmem>>, vector<1x1x32xf32>
    %95 = vector.shape_cast %94 : vector<1x1x32xf32> to vector<1x32xf32>
    %cst_56 = arith.constant dense<0.000000e+00> : vector<8xf32>
    %96 = vector.multi_reduction <add>, %91, %cst_56 [1] : vector<8x32xf32> to vector<8xf32>
    %97 = vector.shape_cast %96 : vector<8xf32> to vector<8x1xf32>
    %cst_57 = arith.constant 3.200000e+01 : f32
    %98 = vector.broadcast %cst_57 : f32 to vector<8x1xf32>
    %99 = arith.divf %97, %98 : vector<8x1xf32>
    %100 = vector.broadcast %99 : vector<8x1xf32> to vector<8x32xf32>
    %101 = arith.subf %91, %100 : vector<8x32xf32>
    %102 = arith.mulf %101, %101 : vector<8x32xf32>
    %cst_58 = arith.constant dense<0.000000e+00> : vector<8xf32>
    %103 = vector.multi_reduction <add>, %102, %cst_58 [1] : vector<8x32xf32> to vector<8xf32>
    %104 = vector.shape_cast %103 : vector<8xf32> to vector<8x1xf32>
    %cst_59 = arith.constant 3.200000e+01 : f32
    %105 = vector.broadcast %cst_59 : f32 to vector<8x1xf32>
    %106 = arith.divf %104, %105 : vector<8x1xf32>
    %107 = vector.broadcast %99 : vector<8x1xf32> to vector<8x32xf32>
    %108 = arith.subf %91, %107 : vector<8x32xf32>
    %cst_60 = arith.constant 9.99999974E-6 : f32
    %109 = vector.broadcast %cst_60 : f32 to vector<8x1xf32>
    %110 = arith.addf %106, %109 : vector<8x1xf32>
    %111 = math.rsqrt %110 : vector<8x1xf32>
    %112 = vector.broadcast %111 : vector<8x1xf32> to vector<8x32xf32>
    %113 = arith.mulf %108, %112 : vector<8x32xf32>
    %114 = vector.broadcast %93 : vector<1x32xf32> to vector<8x32xf32>
    %115 = arith.mulf %113, %114 : vector<8x32xf32>
    %116 = vector.broadcast %95 : vector<1x32xf32> to vector<8x32xf32>
    %117 = arith.addf %115, %116 : vector<8x32xf32>
    %118 = arith.truncf %117 : vector<8x32xf32> to vector<8x32xbf16>
    %c1_61 = arith.constant 1 : index
    %c0_62 = arith.constant 0 : index
    %c0_63 = arith.constant 0 : index
    %119 = vector.load %arg3[%c1_61, %c0_62, %c0_63] : memref<2x8x32xf32, #tpu.memory_space<vmem>>, vector<1x1x32xf32>
    %120 = vector.shape_cast %119 : vector<1x1x32xf32> to vector<1x32xf32>
    %c1_64 = arith.constant 1 : index
    %c1_65 = arith.constant 1 : index
    %c0_66 = arith.constant 0 : index
    %121 = vector.load %arg3[%c1_64, %c1_65, %c0_66] : memref<2x8x32xf32, #tpu.memory_space<vmem>>, vector<1x1x32xf32>
    %122 = vector.shape_cast %121 : vector<1x1x32xf32> to vector<1x32xf32>
    %c1_67 = arith.constant 1 : index
    %c2_68 = arith.constant 2 : index
    %c0_69 = arith.constant 0 : index
    %123 = vector.load %arg3[%c1_67, %c2_68, %c0_69] : memref<2x8x32xf32, #tpu.memory_space<vmem>>, vector<1x1x32xf32>
    %124 = vector.shape_cast %123 : vector<1x1x32xf32> to vector<1x32xf32>
    %c1_70 = arith.constant 1 : index
    %c0_71 = arith.constant 0 : index
    %c0_72 = arith.constant 0 : index
    %c0_73 = arith.constant 0 : index
    %125 = vector.load %arg2[%c1_70, %c0_71, %c0_72, %c0_73] : memref<2x3x32x32xbf16, #tpu.memory_space<vmem>>, vector<1x1x32x32xbf16>
    %126 = vector.shape_cast %125 : vector<1x1x32x32xbf16> to vector<32x32xbf16>
    %cst_74 = arith.constant dense<0.000000e+00> : vector<8x32xf32>
    %127 = tpu.matmul %118, %126, %cst_74 {dimension_numbers = #tpu.dot_dimension_numbers<[1], [0], [0], [1], [0, 0, 1, 1], [], []>} : vector<8x32xbf16>, vector<32x32xbf16>, vector<8x32xf32> -> vector<8x32xf32>
    %128 = vector.broadcast %120 : vector<1x32xf32> to vector<8x32xf32>
    %129 = arith.addf %127, %128 : vector<8x32xf32>
    %c1_75 = arith.constant 1 : index
    %c1_76 = arith.constant 1 : index
    %c0_77 = arith.constant 0 : index
    %c0_78 = arith.constant 0 : index
    %130 = vector.load %arg2[%c1_75, %c1_76, %c0_77, %c0_78] : memref<2x3x32x32xbf16, #tpu.memory_space<vmem>>, vector<1x1x32x32xbf16>
    %131 = vector.shape_cast %130 : vector<1x1x32x32xbf16> to vector<32x32xbf16>
    %cst_79 = arith.constant dense<0.000000e+00> : vector<8x32xf32>
    %132 = tpu.matmul %118, %131, %cst_79 {dimension_numbers = #tpu.dot_dimension_numbers<[1], [0], [0], [1], [0, 0, 1, 1], [], []>} : vector<8x32xbf16>, vector<32x32xbf16>, vector<8x32xf32> -> vector<8x32xf32>
    %133 = vector.broadcast %122 : vector<1x32xf32> to vector<8x32xf32>
    %134 = arith.addf %132, %133 : vector<8x32xf32>
    %c1_80 = arith.constant 1 : index
    %c2_81 = arith.constant 2 : index
    %c0_82 = arith.constant 0 : index
    %c0_83 = arith.constant 0 : index
    %135 = vector.load %arg2[%c1_80, %c2_81, %c0_82, %c0_83] : memref<2x3x32x32xbf16, #tpu.memory_space<vmem>>, vector<1x1x32x32xbf16>
    %136 = vector.shape_cast %135 : vector<1x1x32x32xbf16> to vector<32x32xbf16>
    %cst_84 = arith.constant dense<0.000000e+00> : vector<8x32xf32>
    %137 = tpu.matmul %118, %136, %cst_84 {dimension_numbers = #tpu.dot_dimension_numbers<[1], [0], [0], [1], [0, 0, 1, 1], [], []>} : vector<8x32xbf16>, vector<32x32xbf16>, vector<8x32xf32> -> vector<8x32xf32>
    %138 = arith.truncf %129 : vector<8x32xf32> to vector<8x32xbf16>
    %139 = arith.truncf %134 : vector<8x32xf32> to vector<8x32xbf16>
    %cst_85 = arith.constant dense<0.000000e+00> : vector<8x8xf32>
    %140 = tpu.matmul %138, %139, %cst_85 {dimension_numbers = #tpu.dot_dimension_numbers<[1], [1], [0], [0], [0, 0, 1, 0], [], []>} : vector<8x32xbf16>, vector<8x32xbf16>, vector<8x8xf32> -> vector<8x8xf32>
    %141 = arith.addf %140, %7 : vector<8x8xf32>
    %cst_86 = arith.constant dense<0xFF800000> : vector<8xf32>
    %142 = vector.multi_reduction <maximumf>, %141, %cst_86 [1] : vector<8x8xf32> to vector<8xf32>
    %143 = vector.shape_cast %142 : vector<8xf32> to vector<8x1xf32>
    %144 = vector.broadcast %143 : vector<8x1xf32> to vector<8x8xf32>
    %145 = arith.subf %141, %144 : vector<8x8xf32>
    %146 = math.exp %145 : vector<8x8xf32>
    %cst_87 = arith.constant dense<0.000000e+00> : vector<8xf32>
    %147 = vector.multi_reduction <add>, %146, %cst_87 [1] : vector<8x8xf32> to vector<8xf32>
    %148 = vector.shape_cast %147 : vector<8xf32> to vector<8x1xf32>
    %149 = vector.broadcast %148 : vector<8x1xf32> to vector<8x8xf32>
    %150 = arith.divf %146, %149 : vector<8x8xf32>
    %151 = arith.truncf %150 : vector<8x8xf32> to vector<8x8xbf16>
    %152 = arith.truncf %137 : vector<8x32xf32> to vector<8x32xbf16>
    %cst_88 = arith.constant dense<0.000000e+00> : vector<8x32xf32>
    %153 = tpu.matmul %151, %152, %cst_88 {dimension_numbers = #tpu.dot_dimension_numbers<[1], [0], [0], [1], [0, 0, 1, 1], [], []>} : vector<8x8xbf16>, vector<8x32xbf16>, vector<8x32xf32> -> vector<8x32xf32>
    %154 = vector.broadcast %124 : vector<1x32xf32> to vector<8x32xf32>
    %155 = arith.addf %153, %154 : vector<8x32xf32>
    %156 = arith.addf %117, %155 : vector<8x32xf32>
    %c1_89 = arith.constant 1 : index
    %c3_90 = arith.constant 3 : index
    %c0_91 = arith.constant 0 : index
    %157 = vector.load %arg3[%c1_89, %c3_90, %c0_91] : memref<2x8x32xf32, #tpu.memory_space<vmem>>, vector<1x1x32xf32>
    %158 = vector.shape_cast %157 : vector<1x1x32xf32> to vector<1x32xf32>
    %c1_92 = arith.constant 1 : index
    %c4_93 = arith.constant 4 : index
    %c0_94 = arith.constant 0 : index
    %159 = vector.load %arg3[%c1_92, %c4_93, %c0_94] : memref<2x8x32xf32, #tpu.memory_space<vmem>>, vector<1x1x32xf32>
    %160 = vector.shape_cast %159 : vector<1x1x32xf32> to vector<1x32xf32>
    %cst_95 = arith.constant dense<0.000000e+00> : vector<8xf32>
    %161 = vector.multi_reduction <add>, %156, %cst_95 [1] : vector<8x32xf32> to vector<8xf32>
    %162 = vector.shape_cast %161 : vector<8xf32> to vector<8x1xf32>
    %cst_96 = arith.constant 3.200000e+01 : f32
    %163 = vector.broadcast %cst_96 : f32 to vector<8x1xf32>
    %164 = arith.divf %162, %163 : vector<8x1xf32>
    %165 = vector.broadcast %164 : vector<8x1xf32> to vector<8x32xf32>
    %166 = arith.subf %156, %165 : vector<8x32xf32>
    %167 = arith.mulf %166, %166 : vector<8x32xf32>
    %cst_97 = arith.constant dense<0.000000e+00> : vector<8xf32>
    %168 = vector.multi_reduction <add>, %167, %cst_97 [1] : vector<8x32xf32> to vector<8xf32>
    %169 = vector.shape_cast %168 : vector<8xf32> to vector<8x1xf32>
    %cst_98 = arith.constant 3.200000e+01 : f32
    %170 = vector.broadcast %cst_98 : f32 to vector<8x1xf32>
    %171 = arith.divf %169, %170 : vector<8x1xf32>
    %172 = vector.broadcast %164 : vector<8x1xf32> to vector<8x32xf32>
    %173 = arith.subf %156, %172 : vector<8x32xf32>
    %cst_99 = arith.constant 9.99999974E-6 : f32
    %174 = vector.broadcast %cst_99 : f32 to vector<8x1xf32>
    %175 = arith.addf %171, %174 : vector<8x1xf32>
    %176 = math.rsqrt %175 : vector<8x1xf32>
    %177 = vector.broadcast %176 : vector<8x1xf32> to vector<8x32xf32>
    %178 = arith.mulf %173, %177 : vector<8x32xf32>
    %179 = vector.broadcast %158 : vector<1x32xf32> to vector<8x32xf32>
    %180 = arith.mulf %178, %179 : vector<8x32xf32>
    %181 = vector.broadcast %160 : vector<1x32xf32> to vector<8x32xf32>
    %182 = arith.addf %180, %181 : vector<8x32xf32>
    %183 = arith.truncf %182 : vector<8x32xf32> to vector<8x32xbf16>
    %c1_100 = arith.constant 1 : index
    %c0_101 = arith.constant 0 : index
    %c0_102 = arith.constant 0 : index
    %184 = vector.load %arg4[%c1_100, %c0_101, %c0_102] : memref<2x32x64xbf16, #tpu.memory_space<vmem>>, vector<1x32x64xbf16>
    %185 = vector.shape_cast %184 : vector<1x32x64xbf16> to vector<32x64xbf16>
    %cst_103 = arith.constant dense<0.000000e+00> : vector<8x64xf32>
    %186 = tpu.matmul %183, %185, %cst_103 {dimension_numbers = #tpu.dot_dimension_numbers<[1], [0], [0], [1], [0, 0, 1, 1], [], []>} : vector<8x32xbf16>, vector<32x64xbf16>, vector<8x64xf32> -> vector<8x64xf32>
    %c1_104 = arith.constant 1 : index
    %c0_105 = arith.constant 0 : index
    %c0_106 = arith.constant 0 : index
    %187 = vector.load %arg5[%c1_104, %c0_105, %c0_106] : memref<2x1x64xf32, #tpu.memory_space<vmem>>, vector<1x1x64xf32>
    %188 = vector.shape_cast %187 : vector<1x1x64xf32> to vector<1x64xf32>
    %189 = vector.broadcast %188 : vector<1x64xf32> to vector<8x64xf32>
    %190 = arith.addf %186, %189 : vector<8x64xf32>
    %cst_107 = arith.constant 0.000000e+00 : f32
    %191 = vector.broadcast %cst_107 : f32 to vector<8x64xf32>
    %192 = arith.maximumf %190, %191 : vector<8x64xf32>
    %193 = arith.truncf %192 : vector<8x64xf32> to vector<8x64xbf16>
    %c1_108 = arith.constant 1 : index
    %c0_109 = arith.constant 0 : index
    %c0_110 = arith.constant 0 : index
    %194 = vector.load %arg6[%c1_108, %c0_109, %c0_110] : memref<2x64x32xbf16, #tpu.memory_space<vmem>>, vector<1x64x32xbf16>
    %195 = vector.shape_cast %194 : vector<1x64x32xbf16> to vector<64x32xbf16>
    %cst_111 = arith.constant dense<0.000000e+00> : vector<8x32xf32>
    %196 = tpu.matmul %193, %195, %cst_111 {dimension_numbers = #tpu.dot_dimension_numbers<[1], [0], [0], [1], [0, 0, 1, 1], [], []>} : vector<8x64xbf16>, vector<64x32xbf16>, vector<8x32xf32> -> vector<8x32xf32>
    %c1_112 = arith.constant 1 : index
    %c7_113 = arith.constant 7 : index
    %c0_114 = arith.constant 0 : index
    %197 = vector.load %arg3[%c1_112, %c7_113, %c0_114] : memref<2x8x32xf32, #tpu.memory_space<vmem>>, vector<1x1x32xf32>
    %198 = vector.shape_cast %197 : vector<1x1x32xf32> to vector<1x32xf32>
    %199 = vector.broadcast %198 : vector<1x32xf32> to vector<8x32xf32>
    %200 = arith.addf %196, %199 : vector<8x32xf32>
    %201 = arith.addf %182, %200 : vector<8x32xf32>
    %c1_115 = arith.constant 1 : index
    %c5_116 = arith.constant 5 : index
    %c0_117 = arith.constant 0 : index
    %202 = vector.load %arg3[%c1_115, %c5_116, %c0_117] : memref<2x8x32xf32, #tpu.memory_space<vmem>>, vector<1x1x32xf32>
    %203 = vector.shape_cast %202 : vector<1x1x32xf32> to vector<1x32xf32>
    %c1_118 = arith.constant 1 : index
    %c6_119 = arith.constant 6 : index
    %c0_120 = arith.constant 0 : index
    %204 = vector.load %arg3[%c1_118, %c6_119, %c0_120] : memref<2x8x32xf32, #tpu.memory_space<vmem>>, vector<1x1x32xf32>
    %205 = vector.shape_cast %204 : vector<1x1x32xf32> to vector<1x32xf32>
    %cst_121 = arith.constant dense<0.000000e+00> : vector<8xf32>
    %206 = vector.multi_reduction <add>, %201, %cst_121 [1] : vector<8x32xf32> to vector<8xf32>
    %207 = vector.shape_cast %206 : vector<8xf32> to vector<8x1xf32>
    %cst_122 = arith.constant 3.200000e+01 : f32
    %208 = vector.broadcast %cst_122 : f32 to vector<8x1xf32>
    %209 = arith.divf %207, %208 : vector<8x1xf32>
    %210 = vector.broadcast %209 : vector<8x1xf32> to vector<8x32xf32>
    %211 = arith.subf %201, %210 : vector<8x32xf32>
    %212 = arith.mulf %211, %211 : vector<8x32xf32>
    %cst_123 = arith.constant dense<0.000000e+00> : vector<8xf32>
    %213 = vector.multi_reduction <add>, %212, %cst_123 [1] : vector<8x32xf32> to vector<8xf32>
    %214 = vector.shape_cast %213 : vector<8xf32> to vector<8x1xf32>
    %cst_124 = arith.constant 3.200000e+01 : f32
    %215 = vector.broadcast %cst_124 : f32 to vector<8x1xf32>
    %216 = arith.divf %214, %215 : vector<8x1xf32>
    %217 = vector.broadcast %209 : vector<8x1xf32> to vector<8x32xf32>
    %218 = arith.subf %201, %217 : vector<8x32xf32>
    %cst_125 = arith.constant 9.99999974E-6 : f32
    %219 = vector.broadcast %cst_125 : f32 to vector<8x1xf32>
    %220 = arith.addf %216, %219 : vector<8x1xf32>
    %221 = math.rsqrt %220 : vector<8x1xf32>
    %222 = vector.broadcast %221 : vector<8x1xf32> to vector<8x32xf32>
    %223 = arith.mulf %218, %222 : vector<8x32xf32>
    %224 = vector.broadcast %203 : vector<1x32xf32> to vector<8x32xf32>
    %225 = arith.mulf %223, %224 : vector<8x32xf32>
    %226 = vector.broadcast %205 : vector<1x32xf32> to vector<8x32xf32>
    %227 = arith.addf %225, %226 : vector<8x32xf32>
    %228 = arith.truncf %227 : vector<8x32xf32> to vector<8x32xbf16>
    %c0_126 = arith.constant 0 : index
    %c0_127 = arith.constant 0 : index
    %229 = vector.load %arg7[%c0_126, %c0_127] : memref<32x128xbf16, #tpu.memory_space<vmem>>, vector<32x128xbf16>
    %cst_128 = arith.constant dense<0.000000e+00> : vector<8x128xf32>
    %230 = tpu.matmul %228, %229, %cst_128 {dimension_numbers = #tpu.dot_dimension_numbers<[1], [0], [0], [1], [0, 0, 1, 1], [], []>} : vector<8x32xbf16>, vector<32x128xbf16>, vector<8x128xf32> -> vector<8x128xf32>
    %c0_129 = arith.constant 0 : index
    %c0_130 = arith.constant 0 : index
    %231 = vector.load %arg8[%c0_129, %c0_130] : memref<1x128xf32, #tpu.memory_space<vmem>>, vector<1x128xf32>
    %232 = vector.broadcast %231 : vector<1x128xf32> to vector<8x128xf32>
    %233 = arith.addf %230, %232 : vector<8x128xf32>
    %c0_131 = arith.constant 0 : index
    %c0_132 = arith.constant 0 : index
    %c0_133 = arith.constant 0 : index
    %234 = vector.load %arg9[%c0_131, %c0_132, %c0_133] : memref<1x8x128xf32, #tpu.memory_space<vmem>>, vector<1x8x128xf32>
    %235 = vector.shape_cast %234 : vector<1x8x128xf32> to vector<8x128xf32>
    %236 = vector.shape_cast %233 : vector<8x128xf32> to vector<1x8x128xf32>
    tpu.vector_store %arg9[%c0_131, %c0_132, %c0_133], %236 {strides = array<i32>} : memref<1x8x128xf32, #tpu.memory_space<vmem>>, vector<1x8x128xf32>,
    return
  }
  func.func @transform_0(%arg0: i32) -> (i32, i32, i32) {
    %c0_i32 = arith.constant 0 : i32
    %c0_i32_0 = arith.constant 0 : i32
    %c0_i32_1 = arith.constant 0 : i32
    return %arg0, %c0_i32, %c0_i32_0 : i32, i32, i32
  }
  func.func @transform_1(%arg0: i32) -> (i32, i32, i32, i32) {
    %c0_i32 = arith.constant 0 : i32
    %c0_i32_0 = arith.constant 0 : i32
    %c0_i32_1 = arith.constant 0 : i32
    %c0_i32_2 = arith.constant 0 : i32
    %c0_i32_3 = arith.constant 0 : i32
    return %c0_i32, %c0_i32_0, %c0_i32_1, %c0_i32_2 : i32, i32, i32, i32
  }
  func.func @transform_2(%arg0: i32) -> (i32, i32, i32) {
    %c0_i32 = arith.constant 0 : i32
    %c0_i32_0 = arith.constant 0 : i32
    %c0_i32_1 = arith.constant 0 : i32
    %c0_i32_2 = arith.constant 0 : i32
    return %c0_i32, %c0_i32_0, %c0_i32_1 : i32, i32, i32
  }
  func.func @transform_3(%arg0: i32) -> (i32, i32, i32) {
    %c0_i32 = arith.constant 0 : i32
    %c0_i32_0 = arith.constant 0 : i32
    %c0_i32_1 = arith.constant 0 : i32
    %c0_i32_2 = arith.constant 0 : i32
    return %c0_i32, %c0_i32_0, %c0_i32_1 : i32, i32, i32
  }
  func.func @transform_4(%arg0: i32) -> (i32, i32, i32) {
    %c0_i32 = arith.constant 0 : i32
    %c0_i32_0 = arith.constant 0 : i32
    %c0_i32_1 = arith.constant 0 : i32
    %c0_i32_2 = arith.constant 0 : i32
    return %c0_i32, %c0_i32_0, %c0_i32_1 : i32, i32, i32
  }
  func.func @transform_5(%arg0: i32) -> (i32, i32, i32) {
    %c0_i32 = arith.constant 0 : i32
    %c0_i32_0 = arith.constant 0 : i32
    %c0_i32_1 = arith.constant 0 : i32
    %c0_i32_2 = arith.constant 0 : i32
    return %c0_i32, %c0_i32_0, %c0_i32_1 : i32, i32, i32
  }
  func.func @transform_6(%arg0: i32) -> (i32, i32) {
    %c0_i32 = arith.constant 0 : i32
    %c0_i32_0 = arith.constant 0 : i32
    %c0_i32_1 = arith.constant 0 : i32
    return %c0_i32, %c0_i32_0 : i32, i32
  }
  func.func @transform_7(%arg0: i32) -> (i32, i32) {
    %c0_i32 = arith.constant 0 : i32
    %c0_i32_0 = arith.constant 0 : i32
    %c0_i32_1 = arith.constant 0 : i32
    return %c0_i32, %c0_i32_0 : i32, i32
  }
  func.func @transform_8(%arg0: i32) -> (i32, i32, i32) {
    %c0_i32 = arith.constant 0 : i32
    %c0_i32_0 = arith.constant 0 : i32
    %c0_i32_1 = arith.constant 0 : i32
    return %arg0, %c0_i32, %c0_i32_0 : i32, i32, i32
  }
}

</mosaic_0001>

<llo_original>
// kernel: transformer_forward.1
$region0: #{transformer_forward.1}
  #allocation0 [shape = 'u32[]', space=smem, size = 0x4, offset = 0x4, fixed_abs, tag = 'smem constant byte address 0x4 - core index']
  #allocation1 [shape = 'u32[144,128]{1,0:T(1,128)}', space=vmem, size = 0x12000, scoped, tag = 'internal scratch']
  %s0 = inlined_call_operand.vmem [shape: f32[2,8,32], index: 0, kind: input, shape index: {}]
  %s1 = inlined_call_operand.vmem [shape: bf16[2,3,32,32], index: 1, kind: input, shape index: {}]
  %s2 = inlined_call_operand.vmem [shape: f32[2,8,32], index: 2, kind: input, shape index: {}]
  %s3 = inlined_call_operand.vmem [shape: bf16[2,32,64], index: 3, kind: input, shape index: {}]
  %s4 = inlined_call_operand.vmem [shape: f32[2,1,64], index: 4, kind: input, shape index: {}]
  %s5 = inlined_call_operand.vmem [shape: bf16[2,64,32], index: 5, kind: input, shape index: {}]
  %s6 = inlined_call_operand.vmem [shape: bf16[32,128], index: 6, kind: input, shape index: {}]
  %s7 = inlined_call_operand.vmem [shape: f32[1,128], index: 7, kind: input, shape index: {}]
  %s8 = inlined_call_operand.hbm [shape: f32[2,8,128], index: 8, kind: output, shape index: {}]
  %s9 = sld [smem:[#allocation0]]
  $region65: #{transformer_forward.1} parent=0
    _
  %s11 = ssub.s32 1, %s9
  %s12 = scalar_select 0, %s11, %s9
  $region1: #{transformer_forward.1} parent=0
    #allocation2 [shape = 'u8[8192]{0}', space=vmem, size = 0x2000, scoped, tag = 'output window, operand 0']
    #allocation3 [shape = 's32[2]{0}', space=sflag, size = 0x8, scoped, tag = 'scoped memory for transformer_forward.1']
    %13 = vsyncpa [#allocation3], 0
    %s14 = scalar_lea.sflag [#allocation3], 1
    %15 = vsyncpa %s14, 0
    loop: start=0, step=1, limit=4
    $region2: #{transformer_forward.1} parent=1 // loop_pre_header
      _
    $region3: #{transformer_forward.1} parent=1 // loop_header
      %s17 = sphi 0, %s21
      %p18 = scmp.ge.s32.totalorder %s17, 4
      %s27 = sphi 0, %s29
      %s30 = sphi 0, %s27
      %s31 = sphi 0, %s30
      %s47 = sphi 0, %s31
      %s51 = sphi 0, %s51
      %s53 = sphi 0, %s51
      %s54 = sphi 0, %s53
      %s68 = sphi 0, %s54
      %s72 = sphi 0, %s72
      %s74 = sphi 0, %s72
      %s75 = sphi 0, %s74
      %s89 = sphi 0, %s75
      %s93 = sphi 0, %s93
      %s95 = sphi 0, %s93
      %s96 = sphi 0, %s95
      %s110 = sphi 0, %s96
      %s114 = sphi 0, %s114
      %s116 = sphi 0, %s114
      %s117 = sphi 0, %s116
      %s131 = sphi 0, %s117
      %s135 = sphi 0, %s135
      %s137 = sphi 0, %s135
      %s138 = sphi 0, %s137
      %s152 = sphi 0, %s138
      %s156 = sphi 0, %s156
      %s158 = sphi 0, %s156
      %s159 = sphi 0, %s158
      %s173 = sphi 0, %s159
      %s177 = sphi 0, %s177
      %s179 = sphi 0, %s177
      %s180 = sphi 0, %s179
      %s194 = sphi 0, %s180
      %s200 = sphi 0, %s202
      %s203 = sphi 0, %s200
      %s204 = sphi 0, %s203
      %s220 = sphi 0, %s204
    $region4: #{transformer_forward.1} parent=1 // loop_header_branch
      %20 = sbr.rel (%p18) target = $region8
    $region5: #{transformer_forward.1} parent=1 // loop_body
      %s22 = ssub.s32 %s17, 1
      %s23 = ssub.s32 %s17, 2
      %s24 = sadd.s32 %s17, 1
      %s25 = ssub.s32 %s17, %s24
      %p26 = scmp.eq.s32.totalorder %s25, 0
      %s28 = sadd.s32 %s27, 1
      %s29 = scalar_select %p26, %s27, %s28
      %p32 = pneg %p26
      %p33 = scmp.eq.s32.totalorder %s17, 1
      %p34 = por %p32, %p33
      %p35 = scmp.ne.s32.totalorder %s27, %s30
      %p36 = scmp.eq.s32.totalorder %s17, 0
      %p37 = por %p35, %p36
      %p38 = scmp.ne.s32.totalorder %s27, %s30
      %p39 = scmp.eq.s32.totalorder %s22, 1
      %p40 = por %p38, %p39
      %p41 = scmp.ne.s32.totalorder %s30, %s31
      %p42 = scmp.eq.s32.totalorder %s22, 0
      %p43 = por %p41, %p42
      %p44 = scmp.ne.s32.totalorder %s30, %s31
      %p45 = scmp.eq.s32.totalorder %s23, 1
      %p46 = por %p44, %p45
      %p48 = scmp.ne.s32.totalorder %s31, %s47
      %p49 = scmp.eq.s32.totalorder %s23, 0
      %p50 = por %p48, %p49
      %s52 = sadd.s32 %s51, 1
      %p55 = scmp.eq.s32.totalorder %s17, 1
      %p56 = scmp.ne.s32.totalorder %s51, %s53
      %p57 = scmp.eq.s32.totalorder %s17, 0
      %p58 = por %p56, %p57
      %p59 = scmp.ne.s32.totalorder %s51, %s53
      %p60 = scmp.eq.s32.totalorder %s22, 1
      %p61 = por %p59, %p60
      %p62 = scmp.ne.s32.totalorder %s53, %s54
      %p63 = scmp.eq.s32.totalorder %s22, 0
      %p64 = por %p62, %p63
      %p65 = scmp.ne.s32.totalorder %s53, %s54
      %p66 = scmp.eq.s32.totalorder %s23, 1
      %p67 = por %p65, %p66
      %p69 = scmp.ne.s32.totalorder %s54, %s68
      %p70 = scmp.eq.s32.totalorder %s23, 0
      %p71 = por %p69, %p70
      %s73 = sadd.s32 %s72, 1
      %p76 = scmp.eq.s32.totalorder %s17, 1
      %p77 = scmp.ne.s32.totalorder %s72, %s74
      %p78 = scmp.eq.s32.totalorder %s17, 0
      %p79 = por %p77, %p78
      %p80 = scmp.ne.s32.totalorder %s72, %s74
      %p81 = scmp.eq.s32.totalorder %s22, 1
      %p82 = por %p80, %p81
      %p83 = scmp.ne.s32.totalorder %s74, %s75
      %p84 = scmp.eq.s32.totalorder %s22, 0
      %p85 = por %p83, %p84
      %p86 = scmp.ne.s32.totalorder %s74, %s75
      %p87 = scmp.eq.s32.totalorder %s23, 1
      %p88 = por %p86, %p87
      %p90 = scmp.ne.s32.totalorder %s75, %s89
      %p91 = scmp.eq.s32.totalorder %s23, 0
      %p92 = por %p90, %p91
      %s94 = sadd.s32 %s93, 1
      %p97 = scmp.eq.s32.totalorder %s17, 1
      %p98 = scmp.ne.s32.totalorder %s93, %s95
      %p99 = scmp.eq.s32.totalorder %s17, 0
      %p100 = por %p98, %p99
      %p101 = scmp.ne.s32.totalorder %s93, %s95
      %p102 = scmp.eq.s32.totalorder %s22, 1
      %p103 = por %p101, %p102
      %p104 = scmp.ne.s32.totalorder %s95, %s96
      %p105 = scmp.eq.s32.totalorder %s22, 0
      %p106 = por %p104, %p105
      %p107 = scmp.ne.s32.totalorder %s95, %s96
      %p108 = scmp.eq.s32.totalorder %s23, 1
      %p109 = por %p107, %p108
      %p111 = scmp.ne.s32.totalorder %s96, %s110
      %p112 = scmp.eq.s32.totalorder %s23, 0
      %p113 = por %p111, %p112
      %s115 = sadd.s32 %s114, 1
      %p118 = scmp.eq.s32.totalorder %s17, 1
      %p119 = scmp.ne.s32.totalorder %s114, %s116
      %p120 = scmp.eq.s32.totalorder %s17, 0
      %p121 = por %p119, %p120
      %p122 = scmp.ne.s32.totalorder %s114, %s116
      %p123 = scmp.eq.s32.totalorder %s22, 1
      %p124 = por %p122, %p123
      %p125 = scmp.ne.s32.totalorder %s116, %s117
      %p126 = scmp.eq.s32.totalorder %s22, 0
      %p127 = por %p125, %p126
      %p128 = scmp.ne.s32.totalorder %s116, %s117
      %p129 = scmp.eq.s32.totalorder %s23, 1
      %p130 = por %p128, %p129
      %p132 = scmp.ne.s32.totalorder %s117, %s131
      %p133 = scmp.eq.s32.totalorder %s23, 0
      %p134 = por %p132, %p133
      %s136 = sadd.s32 %s135, 1
      %p139 = scmp.eq.s32.totalorder %s17, 1
      %p140 = scmp.ne.s32.totalorder %s135, %s137
      %p141 = scmp.eq.s32.totalorder %s17, 0
      %p142 = por %p140, %p141
      %p143 = scmp.ne.s32.totalorder %s135, %s137
      %p144 = scmp.eq.s32.totalorder %s22, 1
      %p145 = por %p143, %p144
      %p146 = scmp.ne.s32.totalorder %s137, %s138
      %p147 = scmp.eq.s32.totalorder %s22, 0
      %p148 = por %p146, %p147
      %p149 = scmp.ne.s32.totalorder %s137, %s138
      %p150 = scmp.eq.s32.totalorder %s23, 1
      %p151 = por %p149, %p150
      %p153 = scmp.ne.s32.totalorder %s138, %s152
      %p154 = scmp.eq.s32.totalorder %s23, 0
      %p155 = por %p153, %p154
      %s157 = sadd.s32 %s156, 1
      %p160 = scmp.eq.s32.totalorder %s17, 1
      %p161 = scmp.ne.s32.totalorder %s156, %s158
      %p162 = scmp.eq.s32.totalorder %s17, 0
      %p163 = por %p161, %p162
      %p164 = scmp.ne.s32.totalorder %s156, %s158
      %p165 = scmp.eq.s32.totalorder %s22, 1
      %p166 = por %p164, %p165
      %p167 = scmp.ne.s32.totalorder %s158, %s159
      %p168 = scmp.eq.s32.totalorder %s22, 0
      %p169 = por %p167, %p168
      %p170 = scmp.ne.s32.totalorder %s158, %s159
      %p171 = scmp.eq.s32.totalorder %s23, 1
      %p172 = por %p170, %p171
      %p174 = scmp.ne.s32.totalorder %s159, %s173
      %p175 = scmp.eq.s32.totalorder %s23, 0
      %p176 = por %p174, %p175
      %s178 = sadd.s32 %s177, 1
      %p181 = scmp.eq.s32.totalorder %s17, 1
      %p182 = scmp.ne.s32.totalorder %s177, %s179
      %p183 = scmp.eq.s32.totalorder %s17, 0
      %p184 = por %p182, %p183
      %p185 = scmp.ne.s32.totalorder %s177, %s179
      %p186 = scmp.eq.s32.totalorder %s22, 1
      %p187 = por %p185, %p186
      %p188 = scmp.ne.s32.totalorder %s179, %s180
      %p189 = scmp.eq.s32.totalorder %s22, 0
      %p190 = por %p188, %p189
      %p191 = scmp.ne.s32.totalorder %s179, %s180
      %p192 = scmp.eq.s32.totalorder %s23, 1
      %p193 = por %p191, %p192
      %p195 = scmp.ne.s32.totalorder %s180, %s194
      %p196 = scmp.eq.s32.totalorder %s23, 0
      %p197 = por %p195, %p196
      %s198 = ssub.s32 %s17, %s24
      %p199 = scmp.eq.s32.totalorder %s198, 0
      %s201 = sadd.s32 %s200, 1
      %s202 = scalar_select %p199, %s200, %s201
      %p205 = pneg %p199
      %p206 = scmp.eq.s32.totalorder %s17, 1
      %p207 = por %p205, %p206
      %p208 = scmp.ne.s32.totalorder %s200, %s203
      %p209 = scmp.eq.s32.totalorder %s17, 0
      %p210 = por %p208, %p209
      %p211 = scmp.ne.s32.totalorder %s200, %s203
      %p212 = scmp.eq.s32.totalorder %s22, 1
      %p213 = por %p211, %p212
      %p214 = scmp.ne.s32.totalorder %s203, %s204
      %p215 = scmp.eq.s32.totalorder %s22, 0
      %p216 = por %p214, %p215
      %p217 = scmp.ne.s32.totalorder %s203, %s204
      %p218 = scmp.eq.s32.totalorder %s23, 1
      %p219 = por %p217, %p218
      %p221 = scmp.ne.s32.totalorder %s204, %s220
      %p222 = scmp.eq.s32.totalorder %s23, 0
      %p223 = por %p221, %p222
      %p224 = scmp.le.s32.totalorder 1, %s17
      %p225 = scmp.lt.s32.totalorder %s17, 3
      %p226 = pnand %p224, %p225
      %p227 = pneg %p226
      // Predicated region
      $region9: #{transformer_forward.1} parent=5 // pred_check
        _
      $region10: #{transformer_forward.1} parent=5 // pred_check_branch
        %229 = sbr.rel (%p226) target = $region12
      $region11: #{transformer_forward.1} parent=5 // pred_region
        %s230 = ssub.s32 %s17, 1
        // Predicated region
        $region13: #{transformer_forward.1} parent=11 // pred_check
          %p231 = pneg %p64
        $region14: #{transformer_forward.1} parent=11 // pred_check_branch
          %233 = sbr.rel (%p231) target = $region16
        $region15: #{transformer_forward.1} parent=11 // pred_region
          _
        $region16: #{transformer_forward.1} parent=11 // pred_fallthru
          _
        // Predicated region
        $region17: #{transformer_forward.1} parent=11 // pred_check
          %p234 = pneg %p85
        $region18: #{transformer_forward.1} parent=11 // pred_check_branch
          %236 = sbr.rel (%p234) target = $region20
        $region19: #{transformer_forward.1} parent=11 // pred_region
          _
        $region20: #{transformer_forward.1} parent=11 // pred_fallthru
          _
        // Predicated region
        $region21: #{transformer_forward.1} parent=11 // pred_check
          %p237 = pneg %p106
        $region22: #{transformer_forward.1} parent=11 // pred_check_branch
          %239 = sbr.rel (%p237) target = $region24
        $region23: #{transformer_forward.1} parent=11 // pred_region
          _
        $region24: #{transformer_forward.1} parent=11 // pred_fallthru
          _
        // Predicated region
        $region25: #{transformer_forward.1} parent=11 // pred_check
          %p240 = pneg %p127
        $region26: #{transformer_forward.1} parent=11 // pred_check_branch
          %242 = sbr.rel (%p240) target = $region28
        $region27: #{transformer_forward.1} parent=11 // pred_region
          _
        $region28: #{transformer_forward.1} parent=11 // pred_fallthru
          _
        // Predicated region
        $region29: #{transformer_forward.1} parent=11 // pred_check
          %p243 = pneg %p148
        $region30: #{transformer_forward.1} parent=11 // pred_check_branch
          %245 = sbr.rel (%p243) target = $region32
        $region31: #{transformer_forward.1} parent=11 // pred_region
          _
        $region32: #{transformer_forward.1} parent=11 // pred_fallthru
          _
        // Predicated region
        $region33: #{transformer_forward.1} parent=11 // pred_check
          %p246 = pneg %p169
        $region34: #{transformer_forward.1} parent=11 // pred_check_branch
          %248 = sbr.rel (%p246) target = $region36
        $region35: #{transformer_forward.1} parent=11 // pred_region
          _
        $region36: #{transformer_forward.1} parent=11 // pred_fallthru
          _
        // Predicated region
        $region37: #{transformer_forward.1} parent=11 // pred_check
          %p249 = pneg %p190
        $region38: #{transformer_forward.1} parent=11 // pred_check_branch
          %251 = sbr.rel (%p249) target = $region40
        $region39: #{transformer_forward.1} parent=11 // pred_region
          _
        $region40: #{transformer_forward.1} parent=11 // pred_fallthru
          _
      $region12: #{transformer_forward.1} parent=5 // pred_fallthru
        _
      %p252 = scmp.lt.s32.totalorder %s17, 2
      // Predicated region
      $region41: #{transformer_forward.1} parent=5 // pred_check
        %p253 = pneg %p252
      $region42: #{transformer_forward.1} parent=5 // pred_check_branch
        %255 = sbr.rel (%p253) target = $region44
      $region43: #{transformer_forward.1} parent=5 // pred_region
        // Predicated region
        $region45: #{transformer_forward.1} parent=43 // pred_check
          %p256 = pneg %p37
        $region46: #{transformer_forward.1} parent=43 // pred_check_branch
          %258 = sbr.rel (%p256) target = $region48
        $region47: #{transformer_forward.1} parent=43 // pred_region
          %p259 = scmp.lt.s32.totalorder %s17, 1
          %s260 = scalar_select %p259, %s17, 1
          %s261 = smul.addr %s260, 8
          %s262 = scalar_lea.vmem %s0, %s261
        $region48: #{transformer_forward.1} parent=43 // pred_fallthru
          _
      $region44: #{transformer_forward.1} parent=5 // pred_fallthru
        _
      %p263 = scmp.le.s32.totalorder 1, %s17
      %p264 = scmp.lt.s32.totalorder %s17, 3
      %p265 = pnand %p263, %p264
      %p266 = pneg %p265
      // Predicated region
      $region49: #{transformer_forward.1} parent=5 // pred_check
        _
      $region50: #{transformer_forward.1} parent=5 // pred_check_branch
        %268 = sbr.rel (%p265) target = $region52
      $region51: #{transformer_forward.1} parent=5 // pred_region
        %s269 = ssub.s32 %s17, 1
        %p270 = scmp.lt.s32.totalorder %s22, 1
        %s271 = scalar_select %p270, %s22, 1
        %s272 = smul.addr %s271, 8
        %s273 = scalar_lea.vmem %s0, %s272
        %p274 = pneg %p43
        %p275 = pneg %p40
        %p276 = pneg %p64
        %p277 = pneg %p61
        %p278 = pneg %p85
        %p279 = pneg %p82
        %p280 = pneg %p106
        %p281 = pneg %p103
        %p282 = pneg %p127
        %p283 = pneg %p124
        %p284 = pneg %p148
        %p285 = pneg %p145
        %p286 = pneg %p169
        %p287 = pneg %p166
        %p288 = pneg %p190
        %p289 = pneg %p187
        %p290 = pneg %p216
        %p291 = pneg %p213
        %s292 = sand.u32 %s203, 1
        %s293 = scalar_lea.sflag [#allocation3], %s292
        %s294 = sand.u32 %s203, 1
        %s295 = smul.addr %s294, 8
        %s296 = scalar_lea.vmem [#allocation2], %s295
        %p297 = scmp.lt.s32.totalorder %s22, 1
        %s298 = scalar_select %p297, %s22, 1
        %s299 = smul.addr %s298, 8
        %s300 = scalar_lea.vmem %s0, %s299
        %v302 = vld [vmem:[%s300] sm:$0xff]
        %v303 = vlaneseq
        %v304 = vshrl.u32 %v303, 7
        %v305 = vlaneseq
        %v306 = vand.u32 %v305, 127
        %vm307 = vcmp.le.s32.totalorder %v306, %v304
        %v308 = vsel %vm307, 0.0, -1e+30
        %v309 = vpack.c.bf16 %v302, %v302
        %v310 = vld [vmem:[%s2] sm:$0x1]
        %v311 = vld [vmem:[%s2 + $0x1] sm:$0x1]
        %v312 = vld [vmem:[%s2 + $0x2] sm:$0x1]
        %v313 = vld [vmem:[%s1] sm:$0xf]
        %v314 = vld [vmem:[%s1 + $0x4] sm:$0xf]
        %v315 = vld [vmem:[%s1 + $0x8] sm:$0xf]
        %v316 = vld [vmem:[%s1 + $0xc] sm:$0xf]
        %v317 = vlaneseq
        %v318 = vshrl.u32 %v317, 7
        %v319 = vsub.s32 0, %v318
        %v320 = vrot.slane %v310, %v319
        %v325 = vunpack.c.l.b16 %v313
        %v326 = vunpack.c.l.b16 %v314
        %v327 = vunpack.c.l.b16 %v315
        %v328 = vunpack.c.l.b16 %v316
        %v329 = vpack.c.b16 %v326, %v325
        %v330 = vpack.c.b16 %v328, %v327
        %vm333 = vcmask 261120
        %v335 = vsel %vm333, %v309, 0
        %337 = vmatprep.subr.bf16.mxu0 0
        %338 = vmatpush1.bf16.msra.mxu0 0
        %339 = vmatprep.subr.bf16.mxu0 0
        %340 = vmatpush1.bf16.msra.mxu0 0
        %341 = vmatprep.subr.bf16.mxu0 0
        %342 = vmatpush1.bf16.msra.mxu0 0
        %343 = vmatprep.subr.bf16.mxu0 0
        %344 = vmatpush1.bf16.msra.mxu0 0
        %345 = vmatprep.subr.bf16.mxu0 0
        %346 = vmatpush1.bf16.msra.mxu0 0
        %347 = vmatprep.subr.bf16.mxu0 0
        %348 = vmatpush1.bf16.msra.mxu0 0
        %349 = vmatprep.subr.bf16.mxu0 0
        %350 = vmatpush1.bf16.msra.mxu0 %v330
        %351 = vmatprep.subr.bf16.mxu0 0
        %352 = vmatpush1.bf16.msra.mxu0 %v329
        %353 = vmatprep.subr.bf16.mxu0 0
        %354 = vmatpush2.bf16.msra.mxu0 0
        %355 = vmatprep.subr.bf16.mxu0 0
        %356 = vmatpush2.bf16.msra.mxu0 0
        %357 = vmatprep.subr.bf16.mxu0 0
        %358 = vmatpush2.bf16.msra.mxu0 0
        %359 = vmatprep.subr.bf16.mxu0 0
        %360 = vmatpush2.bf16.msra.mxu0 0
        %361 = vmatprep.subr.bf16.mxu0 0
        %362 = vmatpush2.bf16.msra.mxu0 0
        %363 = vmatprep.subr.bf16.mxu0 0
        %364 = vmatpush2.bf16.msra.mxu0 0
        %365 = vmatprep.subr.bf16.mxu0 0
        %366 = vmatpush2.bf16.msra.mxu0 0
        %367 = vmatprep.subr.bf16.mxu0 0
        %368 = vmatpush2.bf16.msra.mxu0 0
        %369 = vmatprep.mubr.bf16.mxu0 0
        %370 = vmatmul.mubr.bf16.gmra.mxu0 %v335
        %v371 = vpop.f32.mrf.mxu0
        %v372 = vadd.f32 %v320, %v371
        %v373 = vpop.f32.mrf.mxu0
        %v374 = vpop.f32.mrf.mxu0
        %v375 = vpop.f32.mrf.mxu0
        %376 = vdwg.mxu0
        %s377 = scalar_lea.vmem %s1, 16
        %v378 = vld [vmem:[%s377] sm:$0xf]
        %v379 = vld [vmem:[%s377 + $0x4] sm:$0xf]
        %v380 = vld [vmem:[%s377 + $0x8] sm:$0xf]
        %v381 = vld [vmem:[%s377 + $0xc] sm:$0xf]
        %v382 = vlaneseq
        %v383 = vshrl.u32 %v382, 7
        %v384 = vsub.s32 0, %v383
        %v385 = vrot.slane %v311, %v384
        %v390 = vunpack.c.l.b16 %v378
        %v391 = vunpack.c.l.b16 %v379
        %v392 = vunpack.c.l.b16 %v380
        %v393 = vunpack.c.l.b16 %v381
        %v394 = vpack.c.b16 %v391, %v390
        %v395 = vpack.c.b16 %v393, %v392
        %398 = vmatprep.subr.bf16.mxu0 0
        %399 = vmatpush1.bf16.msra.mxu0 0
        %400 = vmatprep.subr.bf16.mxu0 0
        %401 = vmatpush1.bf16.msra.mxu0 0
        %402 = vmatprep.subr.bf16.mxu0 0
        %403 = vmatpush1.bf16.msra.mxu0 0
        %404 = vmatprep.subr.bf16.mxu0 0
        %405 = vmatpush1.bf16.msra.mxu0 0
        %406 = vmatprep.subr.bf16.mxu0 0
        %407 = vmatpush1.bf16.msra.mxu0 0
        %408 = vmatprep.subr.bf16.mxu0 0
        %409 = vmatpush1.bf16.msra.mxu0 0
        %410 = vmatprep.subr.bf16.mxu0 0
        %411 = vmatpush1.bf16.msra.mxu0 %v395
        %412 = vmatprep.subr.bf16.mxu0 0
        %413 = vmatpush1.bf16.msra.mxu0 %v394
        %414 = vmatprep.subr.bf16.mxu0 0
        %415 = vmatpush2.bf16.msra.mxu0 0
        %416 = vmatprep.subr.bf16.mxu0 0
        %417 = vmatpush2.bf16.msra.mxu0 0
        %418 = vmatprep.subr.bf16.mxu0 0
        %419 = vmatpush2.bf16.msra.mxu0 0
        %420 = vmatprep.subr.bf16.mxu0 0
        %421 = vmatpush2.bf16.msra.mxu0 0
        %422 = vmatprep.subr.bf16.mxu0 0
        %423 = vmatpush2.bf16.msra.mxu0 0
        %424 = vmatprep.subr.bf16.mxu0 0
        %425 = vmatpush2.bf16.msra.mxu0 0
        %426 = vmatprep.subr.bf16.mxu0 0
        %427 = vmatpush2.bf16.msra.mxu0 0
        %428 = vmatprep.subr.bf16.mxu0 0
        %429 = vmatpush2.bf16.msra.mxu0 0
        %430 = vmatprep.mubr.bf16.mxu0 0
        %431 = vmatmul.mubr.bf16.gmra.mxu0 %v335
        %v432 = vpop.f32.mrf.mxu0
        %v433 = vadd.f32 %v385, %v432
        %v434 = vpop.f32.mrf.mxu0
        %v435 = vpop.f32.mrf.mxu0
        %v436 = vpop.f32.mrf.mxu0
        %437 = vdwg.mxu0
        %s438 = scalar_lea.vmem %s1, 32
        %v439 = vld [vmem:[%s438] sm:$0xf]
        %v440 = vld [vmem:[%s438 + $0x4] sm:$0xf]
        %v441 = vld [vmem:[%s438 + $0x8] sm:$0xf]
        %v442 = vld [vmem:[%s438 + $0xc] sm:$0xf]
        %v447 = vunpack.c.l.b16 %v439
        %v448 = vunpack.c.l.b16 %v440
        %v449 = vunpack.c.l.b16 %v441
        %v450 = vunpack.c.l.b16 %v442
        %v451 = vpack.c.b16 %v448, %v447
        %v452 = vpack.c.b16 %v450, %v449
        %455 = vmatprep.subr.bf16.mxu0 0
        %456 = vmatpush1.bf16.msra.mxu0 0
        %457 = vmatprep.subr.bf16.mxu0 0
        %458 = vmatpush1.bf16.msra.mxu0 0
        %459 = vmatprep.subr.bf16.mxu0 0
        %460 = vmatpush1.bf16.msra.mxu0 0
        %461 = vmatprep.subr.bf16.mxu0 0
        %462 = vmatpush1.bf16.msra.mxu0 0
        %463 = vmatprep.subr.bf16.mxu0 0
        %464 = vmatpush1.bf16.msra.mxu0 0
        %465 = vmatprep.subr.bf16.mxu0 0
        %466 = vmatpush1.bf16.msra.mxu0 0
        %467 = vmatprep.subr.bf16.mxu0 0
        %468 = vmatpush1.bf16.msra.mxu0 %v452
        %469 = vmatprep.subr.bf16.mxu0 0
        %470 = vmatpush1.bf16.msra.mxu0 %v451
        %471 = vmatprep.subr.bf16.mxu0 0
        %472 = vmatpush2.bf16.msra.mxu0 0
        %473 = vmatprep.subr.bf16.mxu0 0
        %474 = vmatpush2.bf16.msra.mxu0 0
        %475 = vmatprep.subr.bf16.mxu0 0
        %476 = vmatpush2.bf16.msra.mxu0 0
        %477 = vmatprep.subr.bf16.mxu0 0
        %478 = vmatpush2.bf16.msra.mxu0 0
        %479 = vmatprep.subr.bf16.mxu0 0
        %480 = vmatpush2.bf16.msra.mxu0 0
        %481 = vmatprep.subr.bf16.mxu0 0
        %482 = vmatpush2.bf16.msra.mxu0 0
        %483 = vmatprep.subr.bf16.mxu0 0
        %484 = vmatpush2.bf16.msra.mxu0 0
        %485 = vmatprep.subr.bf16.mxu0 0
        %486 = vmatpush2.bf16.msra.mxu0 0
        %487 = vmatprep.mubr.bf16.mxu0 0
        %488 = vmatmul.mubr.bf16.gmra.mxu0 %v335
        %v489 = vpop.f32.mrf.mxu0
        %v490 = vadd.f32 0.0, %v489
        %v491 = vpop.f32.mrf.mxu0
        %v492 = vpop.f32.mrf.mxu0
        %v493 = vpop.f32.mrf.mxu0
        %494 = vdwg.mxu0
        %v495 = vpack.c.bf16 %v372, %v372
        %v496 = vpack.c.bf16 %v433, %v433
        %v498 = vsel %vm333, %v495, 0
        %v501 = vsel %vm333, %v496, 0
        %503 = vmatprep.subr.bf16.mxu0 0
        %504 = vmatpush1.bf16.xpose.msra.mxu0 0
        %505 = vmatprep.subr.bf16.mxu0 0
        %506 = vmatpush1.bf16.xpose.msra.mxu0 0
        %507 = vmatprep.subr.bf16.mxu0 0
        %508 = vmatpush1.bf16.xpose.msra.mxu0 0
        %509 = vmatprep.subr.bf16.mxu0 0
        %510 = vmatpush1.bf16.xpose.msra.mxu0 0
        %511 = vmatprep.subr.bf16.mxu0 0
        %512 = vmatpush1.bf16.xpose.msra.mxu0 0
        %513 = vmatprep.subr.bf16.mxu0 0
        %514 = vmatpush1.bf16.xpose.msra.mxu0 0
        %515 = vmatprep.subr.bf16.mxu0 0
        %516 = vmatpush1.bf16.xpose.msra.mxu0 0
        %517 = vmatprep.subr.bf16.mxu0 0
        %518 = vmatpush1.bf16.xpose.msra.mxu0 %v501
        %519 = vmatprep.subr.bf16.mxu0 0
        %520 = vmatpush2.bf16.xpose.msra.mxu0 0
        %521 = vmatprep.subr.bf16.mxu0 0
        %522 = vmatpush2.bf16.xpose.msra.mxu0 0
        %523 = vmatprep.subr.bf16.mxu0 0
        %524 = vmatpush2.bf16.xpose.msra.mxu0 0
        %525 = vmatprep.subr.bf16.mxu0 0
        %526 = vmatpush2.bf16.xpose.msra.mxu0 0
        %527 = vmatprep.subr.bf16.mxu0 0
        %528 = vmatpush2.bf16.xpose.msra.mxu0 0
        %529 = vmatprep.subr.bf16.mxu0 0
        %530 = vmatpush2.bf16.xpose.msra.mxu0 0
        %531 = vmatprep.subr.bf16.mxu0 0
        %532 = vmatpush2.bf16.xpose.msra.mxu0 0
        %533 = vmatprep.subr.bf16.mxu0 0
        %534 = vmatpush2.bf16.xpose.msra.mxu0 0
        %535 = vmatprep.mubr.bf16.mxu0 0
        %536 = vmatmul.mubr.bf16.gmra.mxu0 %v498
        %v537 = vpop.f32.mrf.mxu0
        %v538 = vadd.f32 %v308, %v537
        %v539 = vpop.f32.mrf.mxu0
        %v540 = vpop.f32.mrf.mxu0
        %v541 = vpop.f32.mrf.mxu0
        %542 = vdwg.mxu0
        %vm543 = vcmask 64512
        %v544 = vsel %vm543, %v538, -inf
        %545 = vmax.xlane.f32.xlu0 %v544
        %v546 = vpop.xlane.xlu0 %545
        %v547 = vsub.f32 %v538, %v546
        %v548 = vmul.f32 %v547, 1.442695
        %v549 = vpow.pop %v548
        %v550 = vsel %vm543, %v549, 0.0
        %551 = vadd.xlane.f32.xlu0 %v550
        %v552 = vpop.xlane.xlu0 %551
        %v553 = vrcp.pop %v552
        %v554 = vmul.f32 %v549, %v553
        %v555 = vpack.c.bf16 %v554, %v554
        %v556 = vpack.c.bf16 %v490, %v490
        %v557 = vlaneseq
        %v558 = vshrl.u32 %v557, 7
        %v559 = vsub.s32 0, %v558
        %v560 = vrot.slane %v312, %v559
        %v562 = vsel %vm543, %v555, 0
        %vm564 = vcmask 1043456
        %v566 = vsel %vm564, %v556, 0
        %568 = vmatprep.subr.bf16.mxu0 0
        %569 = vmatpush1.bf16.msra.mxu0 0
        %570 = vmatprep.subr.bf16.mxu0 0
        %571 = vmatpush1.bf16.msra.mxu0 0
        %572 = vmatprep.subr.bf16.mxu0 0
        %573 = vmatpush1.bf16.msra.mxu0 0
        %574 = vmatprep.subr.bf16.mxu0 0
        %575 = vmatpush1.bf16.msra.mxu0 0
        %576 = vmatprep.subr.bf16.mxu0 0
        %577 = vmatpush1.bf16.msra.mxu0 0
        %578 = vmatprep.subr.bf16.mxu0 0
        %579 = vmatpush1.bf16.msra.mxu0 0
        %580 = vmatprep.subr.bf16.mxu0 0
        %581 = vmatpush1.bf16.msra.mxu0 0
        %582 = vmatprep.subr.bf16.mxu0 0
        %583 = vmatpush1.bf16.msra.mxu0 %v566
        %584 = vmatprep.subr.bf16.mxu0 0
        %585 = vmatpush2.bf16.msra.mxu0 0
        %586 = vmatprep.subr.bf16.mxu0 0
        %587 = vmatpush2.bf16.msra.mxu0 0
        %588 = vmatprep.subr.bf16.mxu0 0
        %589 = vmatpush2.bf16.msra.mxu0 0
        %590 = vmatprep.subr.bf16.mxu0 0
        %591 = vmatpush2.bf16.msra.mxu0 0
        %592 = vmatprep.subr.bf16.mxu0 0
        %593 = vmatpush2.bf16.msra.mxu0 0
        %594 = vmatprep.subr.bf16.mxu0 0
        %595 = vmatpush2.bf16.msra.mxu0 0
        %596 = vmatprep.subr.bf16.mxu0 0
        %597 = vmatpush2.bf16.msra.mxu0 0
        %598 = vmatprep.subr.bf16.mxu0 0
        %599 = vmatpush2.bf16.msra.mxu0 0
        %600 = vmatprep.mubr.bf16.mxu0 0
        %601 = vmatmul.mubr.bf16.gmra.mxu0 %v562
        %v602 = vpop.f32.mrf.mxu0
        %v603 = vadd.f32 %v560, %v602
        %v604 = vpop.f32.mrf.mxu0
        %v605 = vpop.f32.mrf.mxu0
        %v606 = vpop.f32.mrf.mxu0
        %607 = vdwg.mxu0
        %v608 = vadd.f32 %v302, %v603
        %v609 = vld [vmem:[%s2 + $0x3] sm:$0x1]
        %v610 = vld [vmem:[%s2 + $0x4] sm:$0x1]
        %v611 = vsel %vm333, %v608, 0.0
        %612 = vadd.xlane.f32.xlu0 %v611
        %v613 = vpop.xlane.xlu0 %612
        %v614 = vrcp.pop 32.0
        %v615 = vmul.f32 %v613, %v614
        %v616 = vsub.f32 %v608, %v615
        %v617 = vmul.f32 %v616, %v616
        %v618 = vsel %vm333, %v617, 0.0
        %619 = vadd.xlane.f32.xlu0 %v618
        %v620 = vpop.xlane.xlu0 %619
        %v621 = vmul.f32 %v620, %v614
        %v622 = vadd.f32 %v621, 1e-05
        %v623 = vrsqrt.pop %v622
        %v624 = vmul.f32 %v616, %v623
        %v625 = vlaneseq
        %v626 = vshrl.u32 %v625, 7
        %v627 = vsub.s32 0, %v626
        %v628 = vrot.slane %v609, %v627
        %v629 = vmul.f32 %v624, %v628
        %v630 = vlaneseq
        %v631 = vshrl.u32 %v630, 7
        %v632 = vsub.s32 0, %v631
        %v633 = vrot.slane %v610, %v632
        %v634 = vadd.f32 %v629, %v633
        %v635 = vpack.c.bf16 %v634, %v634
        %v636 = vld [vmem:[%s3] sm:$0xf]
        %v637 = vld [vmem:[%s3 + $0x4] sm:$0xf]
        %v638 = vld [vmem:[%s3 + $0x8] sm:$0xf]
        %v639 = vld [vmem:[%s3 + $0xc] sm:$0xf]
        %v640 = vld [vmem:[%s4] sm:$0x1]
        %v642 = vlaneseq
        %v643 = vshrl.u32 %v642, 7
        %v644 = vsub.s32 0, %v643
        %v645 = vrot.slane %v640, %v644
        %v651 = vunpack.c.l.b16 %v636
        %v652 = vunpack.c.l.b16 %v637
        %v653 = vunpack.c.l.b16 %v638
        %v654 = vunpack.c.l.b16 %v639
        %v655 = vpack.c.b16 %v652, %v651
        %v656 = vpack.c.b16 %v654, %v653
        %v660 = vsel %vm333, %v635, 0
        %662 = vmatprep.subr.bf16.mxu0 0
        %663 = vmatpush1.bf16.msra.mxu0 0
        %664 = vmatprep.subr.bf16.mxu0 0
        %665 = vmatpush1.bf16.msra.mxu0 0
        %666 = vmatprep.subr.bf16.mxu0 0
        %667 = vmatpush1.bf16.msra.mxu0 0
        %668 = vmatprep.subr.bf16.mxu0 0
        %669 = vmatpush1.bf16.msra.mxu0 0
        %670 = vmatprep.subr.bf16.mxu0 0
        %671 = vmatpush1.bf16.msra.mxu0 0
        %672 = vmatprep.subr.bf16.mxu0 0
        %673 = vmatpush1.bf16.msra.mxu0 0
        %674 = vmatprep.subr.bf16.mxu0 0
        %675 = vmatpush1.bf16.msra.mxu0 %v656
        %676 = vmatprep.subr.bf16.mxu0 0
        %677 = vmatpush1.bf16.msra.mxu0 %v655
        %678 = vmatprep.subr.bf16.mxu0 0
        %679 = vmatpush2.bf16.msra.mxu0 0
        %680 = vmatprep.subr.bf16.mxu0 0
        %681 = vmatpush2.bf16.msra.mxu0 0
        %682 = vmatprep.subr.bf16.mxu0 0
        %683 = vmatpush2.bf16.msra.mxu0 0
        %684 = vmatprep.subr.bf16.mxu0 0
        %685 = vmatpush2.bf16.msra.mxu0 0
        %686 = vmatprep.subr.bf16.mxu0 0
        %687 = vmatpush2.bf16.msra.mxu0 0
        %688 = vmatprep.subr.bf16.mxu0 0
        %689 = vmatpush2.bf16.msra.mxu0 0
        %690 = vmatprep.subr.bf16.mxu0 0
        %691 = vmatpush2.bf16.msra.mxu0 0
        %692 = vmatprep.subr.bf16.mxu0 0
        %693 = vmatpush2.bf16.msra.mxu0 0
        %694 = vmatprep.mubr.bf16.mxu0 0
        %695 = vmatmul.mubr.bf16.gmra.mxu0 %v660
        %v696 = vpop.f32.mrf.mxu0
        %v697 = vadd.f32 %v645, %v696
        %v698 = vpop.f32.mrf.mxu0
        %v699 = vpop.f32.mrf.mxu0
        %v700 = vpop.f32.mrf.mxu0
        %701 = vdwg.mxu0
        %v702 = vmax.f32 %v697, 0.0
        %v703 = vpack.c.bf16 %v702, %v702
        %v704 = vld [vmem:[%s5] sm:$0xf]
        %v705 = vld [vmem:[%s5 + $0x4] sm:$0xf]
        %v706 = vld [vmem:[%s5 + $0x8] sm:$0xf]
        %v707 = vld [vmem:[%s5 + $0xc] sm:$0xf]
        %v708 = vld [vmem:[%s5 + $0x10] sm:$0xf]
        %v709 = vld [vmem:[%s5 + $0x14] sm:$0xf]
        %v710 = vld [vmem:[%s5 + $0x18] sm:$0xf]
        %v711 = vld [vmem:[%s5 + $0x1c] sm:$0xf]
        %v712 = vld [vmem:[%s2 + $0x7] sm:$0x1]
        %v713 = vlaneseq
        %v714 = vshrl.u32 %v713, 7
        %v715 = vsub.s32 0, %v714
        %v716 = vrot.slane %v712, %v715
        %v725 = vunpack.c.l.b16 %v704
        %v726 = vunpack.c.l.b16 %v705
        %v727 = vunpack.c.l.b16 %v706
        %v728 = vunpack.c.l.b16 %v707
        %v729 = vunpack.c.l.b16 %v708
        %v730 = vunpack.c.l.b16 %v709
        %v731 = vunpack.c.l.b16 %v710
        %v732 = vunpack.c.l.b16 %v711
        %v733 = vpack.c.b16 %v726, %v725
        %v734 = vpack.c.b16 %v728, %v727
        %v735 = vpack.c.b16 %v730, %v729
        %v736 = vpack.c.b16 %v732, %v731
        %vm741 = vcmask 523264
        %v743 = vsel %vm741, %v703, 0
        %745 = vmatprep.subr.bf16.mxu0 0
        %746 = vmatpush1.bf16.msra.mxu0 0
        %747 = vmatprep.subr.bf16.mxu0 0
        %748 = vmatpush1.bf16.msra.mxu0 0
        %749 = vmatprep.subr.bf16.mxu0 0
        %750 = vmatpush1.bf16.msra.mxu0 0
        %751 = vmatprep.subr.bf16.mxu0 0
        %752 = vmatpush1.bf16.msra.mxu0 0
        %753 = vmatprep.subr.bf16.mxu0 0
        %754 = vmatpush1.bf16.msra.mxu0 %v736
        %755 = vmatprep.subr.bf16.mxu0 0
        %756 = vmatpush1.bf16.msra.mxu0 %v735
        %757 = vmatprep.subr.bf16.mxu0 0
        %758 = vmatpush1.bf16.msra.mxu0 %v734
        %759 = vmatprep.subr.bf16.mxu0 0
        %760 = vmatpush1.bf16.msra.mxu0 %v733
        %761 = vmatprep.subr.bf16.mxu0 0
        %762 = vmatpush2.bf16.msra.mxu0 0
        %763 = vmatprep.subr.bf16.mxu0 0
        %764 = vmatpush2.bf16.msra.mxu0 0
        %765 = vmatprep.subr.bf16.mxu0 0
        %766 = vmatpush2.bf16.msra.mxu0 0
        %767 = vmatprep.subr.bf16.mxu0 0
        %768 = vmatpush2.bf16.msra.mxu0 0
        %769 = vmatprep.subr.bf16.mxu0 0
        %770 = vmatpush2.bf16.msra.mxu0 0
        %771 = vmatprep.subr.bf16.mxu0 0
        %772 = vmatpush2.bf16.msra.mxu0 0
        %773 = vmatprep.subr.bf16.mxu0 0
        %774 = vmatpush2.bf16.msra.mxu0 0
        %775 = vmatprep.subr.bf16.mxu0 0
        %776 = vmatpush2.bf16.msra.mxu0 0
        %777 = vmatprep.mubr.bf16.mxu0 0
        %778 = vmatmul.mubr.bf16.gmra.mxu0 %v743
        %v779 = vpop.f32.mrf.mxu0
        %v780 = vadd.f32 %v716, %v779
        %v781 = vpop.f32.mrf.mxu0
        %v782 = vpop.f32.mrf.mxu0
        %v783 = vpop.f32.mrf.mxu0
        %784 = vdwg.mxu0
        %v785 = vadd.f32 %v634, %v780
        %v786 = vld [vmem:[%s2 + $0x5] sm:$0x1]
        %v787 = vld [vmem:[%s2 + $0x6] sm:$0x1]
        %v788 = vsel %vm333, %v785, 0.0
        %789 = vadd.xlane.f32.xlu0 %v788
        %v790 = vpop.xlane.xlu0 %789
        %v791 = vmul.f32 %v790, %v614
        %v792 = vsub.f32 %v785, %v791
        %v793 = vmul.f32 %v792, %v792
        %v794 = vsel %vm333, %v793, 0.0
        %795 = vadd.xlane.f32.xlu0 %v794
        %v796 = vpop.xlane.xlu0 %795
        %v797 = vmul.f32 %v796, %v614
        %v798 = vadd.f32 %v797, 1e-05
        %v799 = vrsqrt.pop %v798
        %v800 = vmul.f32 %v792, %v799
        %v801 = vlaneseq
        %v802 = vshrl.u32 %v801, 7
        %v803 = vsub.s32 0, %v802
        %v804 = vrot.slane %v786, %v803
        %v805 = vmul.f32 %v800, %v804
        %v806 = vlaneseq
        %v807 = vshrl.u32 %v806, 7
        %v808 = vsub.s32 0, %v807
        %v809 = vrot.slane %v787, %v808
        %v810 = vadd.f32 %v805, %v809
        %v811 = vpack.c.bf16 %v810, %v810
        %s812 = scalar_lea.vmem %s2, 8
        %v813 = vld [vmem:[%s812] sm:$0x1]
        %v814 = vld [vmem:[%s812 + $0x1] sm:$0x1]
        %v815 = vld [vmem:[%s812 + $0x2] sm:$0x1]
        %s816 = scalar_lea.vmem %s1, 48
        %v817 = vld [vmem:[%s816] sm:$0xf]
        %v818 = vld [vmem:[%s816 + $0x4] sm:$0xf]
        %v819 = vld [vmem:[%s816 + $0x8] sm:$0xf]
        %v820 = vld [vmem:[%s816 + $0xc] sm:$0xf]
        %v821 = vlaneseq
        %v822 = vshrl.u32 %v821, 7
        %v823 = vsub.s32 0, %v822
        %v824 = vrot.slane %v813, %v823
        %v829 = vunpack.c.l.b16 %v817
        %v830 = vunpack.c.l.b16 %v818
        %v831 = vunpack.c.l.b16 %v819
        %v832 = vunpack.c.l.b16 %v820
        %v833 = vpack.c.b16 %v830, %v829
        %v834 = vpack.c.b16 %v832, %v831
        %v838 = vsel %vm333, %v811, 0
        %840 = vmatprep.subr.bf16.mxu0 0
        %841 = vmatpush1.bf16.msra.mxu0 0
        %842 = vmatprep.subr.bf16.mxu0 0
        %843 = vmatpush1.bf16.msra.mxu0 0
        %844 = vmatprep.subr.bf16.mxu0 0
        %845 = vmatpush1.bf16.msra.mxu0 0
        %846 = vmatprep.subr.bf16.mxu0 0
        %847 = vmatpush1.bf16.msra.mxu0 0
        %848 = vmatprep.subr.bf16.mxu0 0
        %849 = vmatpush1.bf16.msra.mxu0 0
        %850 = vmatprep.subr.bf16.mxu0 0
        %851 = vmatpush1.bf16.msra.mxu0 0
        %852 = vmatprep.subr.bf16.mxu0 0
        %853 = vmatpush1.bf16.msra.mxu0 %v834
        %854 = vmatprep.subr.bf16.mxu0 0
        %855 = vmatpush1.bf16.msra.mxu0 %v833
        %856 = vmatprep.subr.bf16.mxu0 0
        %857 = vmatpush2.bf16.msra.mxu0 0
        %858 = vmatprep.subr.bf16.mxu0 0
        %859 = vmatpush2.bf16.msra.mxu0 0
        %860 = vmatprep.subr.bf16.mxu0 0
        %861 = vmatpush2.bf16.msra.mxu0 0
        %862 = vmatprep.subr.bf16.mxu0 0
        %863 = vmatpush2.bf16.msra.mxu0 0
        %864 = vmatprep.subr.bf16.mxu0 0
        %865 = vmatpush2.bf16.msra.mxu0 0
        %866 = vmatprep.subr.bf16.mxu0 0
        %867 = vmatpush2.bf16.msra.mxu0 0
        %868 = vmatprep.subr.bf16.mxu0 0
        %869 = vmatpush2.bf16.msra.mxu0 0
        %870 = vmatprep.subr.bf16.mxu0 0
        %871 = vmatpush2.bf16.msra.mxu0 0
        %872 = vmatprep.mubr.bf16.mxu0 0
        %873 = vmatmul.mubr.bf16.gmra.mxu0 %v838
        %v874 = vpop.f32.mrf.mxu0
        %v875 = vadd.f32 %v824, %v874
        %v876 = vpop.f32.mrf.mxu0
        %v877 = vpop.f32.mrf.mxu0
        %v878 = vpop.f32.mrf.mxu0
        %879 = vdwg.mxu0
        %s880 = scalar_lea.vmem %s1, 64
        %v881 = vld [vmem:[%s880] sm:$0xf]
        %v882 = vld [vmem:[%s880 + $0x4] sm:$0xf]
        %v883 = vld [vmem:[%s880 + $0x8] sm:$0xf]
        %v884 = vld [vmem:[%s880 + $0xc] sm:$0xf]
        %v885 = vlaneseq
        %v886 = vshrl.u32 %v885, 7
        %v887 = vsub.s32 0, %v886
        %v888 = vrot.slane %v814, %v887
        %v893 = vunpack.c.l.b16 %v881
        %v894 = vunpack.c.l.b16 %v882
        %v895 = vunpack.c.l.b16 %v883
        %v896 = vunpack.c.l.b16 %v884
        %v897 = vpack.c.b16 %v894, %v893
        %v898 = vpack.c.b16 %v896, %v895
        %901 = vmatprep.subr.bf16.mxu0 0
        %902 = vmatpush1.bf16.msra.mxu0 0
        %903 = vmatprep.subr.bf16.mxu0 0
        %904 = vmatpush1.bf16.msra.mxu0 0
        %905 = vmatprep.subr.bf16.mxu0 0
        %906 = vmatpush1.bf16.msra.mxu0 0
        %907 = vmatprep.subr.bf16.mxu0 0
        %908 = vmatpush1.bf16.msra.mxu0 0
        %909 = vmatprep.subr.bf16.mxu0 0
        %910 = vmatpush1.bf16.msra.mxu0 0
        %911 = vmatprep.subr.bf16.mxu0 0
        %912 = vmatpush1.bf16.msra.mxu0 0
        %913 = vmatprep.subr.bf16.mxu0 0
        %914 = vmatpush1.bf16.msra.mxu0 %v898
        %915 = vmatprep.subr.bf16.mxu0 0
        %916 = vmatpush1.bf16.msra.mxu0 %v897
        %917 = vmatprep.subr.bf16.mxu0 0
        %918 = vmatpush2.bf16.msra.mxu0 0
        %919 = vmatprep.subr.bf16.mxu0 0
        %920 = vmatpush2.bf16.msra.mxu0 0
        %921 = vmatprep.subr.bf16.mxu0 0
        %922 = vmatpush2.bf16.msra.mxu0 0
        %923 = vmatprep.subr.bf16.mxu0 0
        %924 = vmatpush2.bf16.msra.mxu0 0
        %925 = vmatprep.subr.bf16.mxu0 0
        %926 = vmatpush2.bf16.msra.mxu0 0
        %927 = vmatprep.subr.bf16.mxu0 0
        %928 = vmatpush2.bf16.msra.mxu0 0
        %929 = vmatprep.subr.bf16.mxu0 0
        %930 = vmatpush2.bf16.msra.mxu0 0
        %931 = vmatprep.subr.bf16.mxu0 0
        %932 = vmatpush2.bf16.msra.mxu0 0
        %933 = vmatprep.mubr.bf16.mxu0 0
        %934 = vmatmul.mubr.bf16.gmra.mxu0 %v838
        %v935 = vpop.f32.mrf.mxu0
        %v936 = vadd.f32 %v888, %v935
        %v937 = vpop.f32.mrf.mxu0
        %v938 = vpop.f32.mrf.mxu0
        %v939 = vpop.f32.mrf.mxu0
        %940 = vdwg.mxu0
        %s941 = scalar_lea.vmem %s1, 80
        %v942 = vld [vmem:[%s941] sm:$0xf]
        %v943 = vld [vmem:[%s941 + $0x4] sm:$0xf]
        %v944 = vld [vmem:[%s941 + $0x8] sm:$0xf]
        %v945 = vld [vmem:[%s941 + $0xc] sm:$0xf]
        %v950 = vunpack.c.l.b16 %v942
        %v951 = vunpack.c.l.b16 %v943
        %v952 = vunpack.c.l.b16 %v944
        %v953 = vunpack.c.l.b16 %v945
        %v954 = vpack.c.b16 %v951, %v950
        %v955 = vpack.c.b16 %v953, %v952
        %958 = vmatprep.subr.bf16.mxu0 0
        %959 = vmatpush1.bf16.msra.mxu0 0
        %960 = vmatprep.subr.bf16.mxu0 0
        %961 = vmatpush1.bf16.msra.mxu0 0
        %962 = vmatprep.subr.bf16.mxu0 0
        %963 = vmatpush1.bf16.msra.mxu0 0
        %964 = vmatprep.subr.bf16.mxu0 0
        %965 = vmatpush1.bf16.msra.mxu0 0
        %966 = vmatprep.subr.bf16.mxu0 0
        %967 = vmatpush1.bf16.msra.mxu0 0
        %968 = vmatprep.subr.bf16.mxu0 0
        %969 = vmatpush1.bf16.msra.mxu0 0
        %970 = vmatprep.subr.bf16.mxu0 0
        %971 = vmatpush1.bf16.msra.mxu0 %v955
        %972 = vmatprep.subr.bf16.mxu0 0
        %973 = vmatpush1.bf16.msra.mxu0 %v954
        %974 = vmatprep.subr.bf16.mxu0 0
        %975 = vmatpush2.bf16.msra.mxu0 0
        %976 = vmatprep.subr.bf16.mxu0 0
        %977 = vmatpush2.bf16.msra.mxu0 0
        %978 = vmatprep.subr.bf16.mxu0 0
        %979 = vmatpush2.bf16.msra.mxu0 0
        %980 = vmatprep.subr.bf16.mxu0 0
        %981 = vmatpush2.bf16.msra.mxu0 0
        %982 = vmatprep.subr.bf16.mxu0 0
        %983 = vmatpush2.bf16.msra.mxu0 0
        %984 = vmatprep.subr.bf16.mxu0 0
        %985 = vmatpush2.bf16.msra.mxu0 0
        %986 = vmatprep.subr.bf16.mxu0 0
        %987 = vmatpush2.bf16.msra.mxu0 0
        %988 = vmatprep.subr.bf16.mxu0 0
        %989 = vmatpush2.bf16.msra.mxu0 0
        %990 = vmatprep.mubr.bf16.mxu0 0
        %991 = vmatmul.mubr.bf16.gmra.mxu0 %v838
        %v992 = vpop.f32.mrf.mxu0
        %v993 = vadd.f32 0.0, %v992
        %v994 = vpop.f32.mrf.mxu0
        %v995 = vpop.f32.mrf.mxu0
        %v996 = vpop.f32.mrf.mxu0
        %997 = vdwg.mxu0
        %v998 = vpack.c.bf16 %v875, %v875
        %v999 = vpack.c.bf16 %v936, %v936
        %v1001 = vsel %vm333, %v998, 0
        %v1004 = vsel %vm333, %v999, 0
        %1006 = vmatprep.subr.bf16.mxu0 0
        %1007 = vmatpush1.bf16.xpose.msra.mxu0 0
        %1008 = vmatprep.subr.bf16.mxu0 0
        %1009 = vmatpush1.bf16.xpose.msra.mxu0 0
        %1010 = vmatprep.subr.bf16.mxu0 0
        %1011 = vmatpush1.bf16.xpose.msra.mxu0 0
        %1012 = vmatprep.subr.bf16.mxu0 0
        %1013 = vmatpush1.bf16.xpose.msra.mxu0 0
        %1014 = vmatprep.subr.bf16.mxu0 0
        %1015 = vmatpush1.bf16.xpose.msra.mxu0 0
        %1016 = vmatprep.subr.bf16.mxu0 0
        %1017 = vmatpush1.bf16.xpose.msra.mxu0 0
        %1018 = vmatprep.subr.bf16.mxu0 0
        %1019 = vmatpush1.bf16.xpose.msra.mxu0 0
        %1020 = vmatprep.subr.bf16.mxu0 0
        %1021 = vmatpush1.bf16.xpose.msra.mxu0 %v1004
        %1022 = vmatprep.subr.bf16.mxu0 0
        %1023 = vmatpush2.bf16.xpose.msra.mxu0 0
        %1024 = vmatprep.subr.bf16.mxu0 0
        %1025 = vmatpush2.bf16.xpose.msra.mxu0 0
        %1026 = vmatprep.subr.bf16.mxu0 0
        %1027 = vmatpush2.bf16.xpose.msra.mxu0 0
        %1028 = vmatprep.subr.bf16.mxu0 0
        %1029 = vmatpush2.bf16.xpose.msra.mxu0 0
        %1030 = vmatprep.subr.bf16.mxu0 0
        %1031 = vmatpush2.bf16.xpose.msra.mxu0 0
        %1032 = vmatprep.subr.bf16.mxu0 0
        %1033 = vmatpush2.bf16.xpose.msra.mxu0 0
        %1034 = vmatprep.subr.bf16.mxu0 0
        %1035 = vmatpush2.bf16.xpose.msra.mxu0 0
        %1036 = vmatprep.subr.bf16.mxu0 0
        %1037 = vmatpush2.bf16.xpose.msra.mxu0 0
        %1038 = vmatprep.mubr.bf16.mxu0 0
        %1039 = vmatmul.mubr.bf16.gmra.mxu0 %v1001
        %v1040 = vpop.f32.mrf.mxu0
        %v1041 = vadd.f32 %v308, %v1040
        %v1042 = vpop.f32.mrf.mxu0
        %v1043 = vpop.f32.mrf.mxu0
        %v1044 = vpop.f32.mrf.mxu0
        %1045 = vdwg.mxu0
        %v1046 = vsel %vm543, %v1041, -inf
        %1047 = vmax.xlane.f32.xlu0 %v1046
        %v1048 = vpop.xlane.xlu0 %1047
        %v1049 = vsub.f32 %v1041, %v1048
        %v1050 = vmul.f32 %v1049, 1.442695
        %v1051 = vpow.pop %v1050
        %v1052 = vsel %vm543, %v1051, 0.0
        %1053 = vadd.xlane.f32.xlu0 %v1052
        %v1054 = vpop.xlane.xlu0 %1053
        %v1055 = vrcp.pop %v1054
        %v1056 = vmul.f32 %v1051, %v1055
        %v1057 = vpack.c.bf16 %v1056, %v1056
        %v1058 = vpack.c.bf16 %v993, %v993
        %v1059 = vlaneseq
        %v1060 = vshrl.u32 %v1059, 7
        %v1061 = vsub.s32 0, %v1060
        %v1062 = vrot.slane %v815, %v1061
        %v1064 = vsel %vm543, %v1057, 0
        %v1067 = vsel %vm564, %v1058, 0
        %1069 = vmatprep.subr.bf16.mxu0 0
        %1070 = vmatpush1.bf16.msra.mxu0 0
        %1071 = vmatprep.subr.bf16.mxu0 0
        %1072 = vmatpush1.bf16.msra.mxu0 0
        %1073 = vmatprep.subr.bf16.mxu0 0
        %1074 = vmatpush1.bf16.msra.mxu0 0
        %1075 = vmatprep.subr.bf16.mxu0 0
        %1076 = vmatpush1.bf16.msra.mxu0 0
        %1077 = vmatprep.subr.bf16.mxu0 0
        %1078 = vmatpush1.bf16.msra.mxu0 0
        %1079 = vmatprep.subr.bf16.mxu0 0
        %1080 = vmatpush1.bf16.msra.mxu0 0
        %1081 = vmatprep.subr.bf16.mxu0 0
        %1082 = vmatpush1.bf16.msra.mxu0 0
        %1083 = vmatprep.subr.bf16.mxu0 0
        %1084 = vmatpush1.bf16.msra.mxu0 %v1067
        %1085 = vmatprep.subr.bf16.mxu0 0
        %1086 = vmatpush2.bf16.msra.mxu0 0
        %1087 = vmatprep.subr.bf16.mxu0 0
        %1088 = vmatpush2.bf16.msra.mxu0 0
        %1089 = vmatprep.subr.bf16.mxu0 0
        %1090 = vmatpush2.bf16.msra.mxu0 0
        %1091 = vmatprep.subr.bf16.mxu0 0
        %1092 = vmatpush2.bf16.msra.mxu0 0
        %1093 = vmatprep.subr.bf16.mxu0 0
        %1094 = vmatpush2.bf16.msra.mxu0 0
        %1095 = vmatprep.subr.bf16.mxu0 0
        %1096 = vmatpush2.bf16.msra.mxu0 0
        %1097 = vmatprep.subr.bf16.mxu0 0
        %1098 = vmatpush2.bf16.msra.mxu0 0
        %1099 = vmatprep.subr.bf16.mxu0 0
        %1100 = vmatpush2.bf16.msra.mxu0 0
        %1101 = vmatprep.mubr.bf16.mxu0 0
        %1102 = vmatmul.mubr.bf16.gmra.mxu0 %v1064
        %v1103 = vpop.f32.mrf.mxu0
        %v1104 = vadd.f32 %v1062, %v1103
        %v1105 = vpop.f32.mrf.mxu0
        %v1106 = vpop.f32.mrf.mxu0
        %v1107 = vpop.f32.mrf.mxu0
        %1108 = vdwg.mxu0
        %v1109 = vadd.f32 %v810, %v1104
        %v1110 = vld [vmem:[%s812 + $0x3] sm:$0x1]
        %v1111 = vld [vmem:[%s812 + $0x4] sm:$0x1]
        %v1112 = vsel %vm333, %v1109, 0.0
        %1113 = vadd.xlane.f32.xlu0 %v1112
        %v1114 = vpop.xlane.xlu0 %1113
        %v1115 = vmul.f32 %v1114, %v614
        %v1116 = vsub.f32 %v1109, %v1115
        %v1117 = vmul.f32 %v1116, %v1116
        %v1118 = vsel %vm333, %v1117, 0.0
        %1119 = vadd.xlane.f32.xlu0 %v1118
        %v1120 = vpop.xlane.xlu0 %1119
        %v1121 = vmul.f32 %v1120, %v614
        %v1122 = vadd.f32 %v1121, 1e-05
        %v1123 = vrsqrt.pop %v1122
        %v1124 = vmul.f32 %v1116, %v1123
        %v1125 = vlaneseq
        %v1126 = vshrl.u32 %v1125, 7
        %v1127 = vsub.s32 0, %v1126
        %v1128 = vrot.slane %v1110, %v1127
        %v1129 = vmul.f32 %v1124, %v1128
        %v1130 = vlaneseq
        %v1131 = vshrl.u32 %v1130, 7
        %v1132 = vsub.s32 0, %v1131
        %v1133 = vrot.slane %v1111, %v1132
        %v1134 = vadd.f32 %v1129, %v1133
        %v1135 = vpack.c.bf16 %v1134, %v1134
        %s1136 = scalar_lea.vmem %s3, 16
        %v1137 = vld [vmem:[%s1136] sm:$0xf]
        %v1138 = vld [vmem:[%s1136 + $0x4] sm:$0xf]
        %v1139 = vld [vmem:[%s1136 + $0x8] sm:$0xf]
        %v1140 = vld [vmem:[%s1136 + $0xc] sm:$0xf]
        %s1141 = scalar_lea.vmem %s4, 1
        %v1142 = vld [vmem:[%s1141] sm:$0x1]
        %v1144 = vlaneseq
        %v1145 = vshrl.u32 %v1144, 7
        %v1146 = vsub.s32 0, %v1145
        %v1147 = vrot.slane %v1142, %v1146
        %v1153 = vunpack.c.l.b16 %v1137
        %v1154 = vunpack.c.l.b16 %v1138
        %v1155 = vunpack.c.l.b16 %v1139
        %v1156 = vunpack.c.l.b16 %v1140
        %v1157 = vpack.c.b16 %v1154, %v1153
        %v1158 = vpack.c.b16 %v1156, %v1155
        %v1162 = vsel %vm333, %v1135, 0
        %1164 = vmatprep.subr.bf16.mxu0 0
        %1165 = vmatpush1.bf16.msra.mxu0 0
        %1166 = vmatprep.subr.bf16.mxu0 0
        %1167 = vmatpush1.bf16.msra.mxu0 0
        %1168 = vmatprep.subr.bf16.mxu0 0
        %1169 = vmatpush1.bf16.msra.mxu0 0
        %1170 = vmatprep.subr.bf16.mxu0 0
        %1171 = vmatpush1.bf16.msra.mxu0 0
        %1172 = vmatprep.subr.bf16.mxu0 0
        %1173 = vmatpush1.bf16.msra.mxu0 0
        %1174 = vmatprep.subr.bf16.mxu0 0
        %1175 = vmatpush1.bf16.msra.mxu0 0
        %1176 = vmatprep.subr.bf16.mxu0 0
        %1177 = vmatpush1.bf16.msra.mxu0 %v1158
        %1178 = vmatprep.subr.bf16.mxu0 0
        %1179 = vmatpush1.bf16.msra.mxu0 %v1157
        %1180 = vmatprep.subr.bf16.mxu0 0
        %1181 = vmatpush2.bf16.msra.mxu0 0
        %1182 = vmatprep.subr.bf16.mxu0 0
        %1183 = vmatpush2.bf16.msra.mxu0 0
        %1184 = vmatprep.subr.bf16.mxu0 0
        %1185 = vmatpush2.bf16.msra.mxu0 0
        %1186 = vmatprep.subr.bf16.mxu0 0
        %1187 = vmatpush2.bf16.msra.mxu0 0
        %1188 = vmatprep.subr.bf16.mxu0 0
        %1189 = vmatpush2.bf16.msra.mxu0 0
        %1190 = vmatprep.subr.bf16.mxu0 0
        %1191 = vmatpush2.bf16.msra.mxu0 0
        %1192 = vmatprep.subr.bf16.mxu0 0
        %1193 = vmatpush2.bf16.msra.mxu0 0
        %1194 = vmatprep.subr.bf16.mxu0 0
        %1195 = vmatpush2.bf16.msra.mxu0 0
        %1196 = vmatprep.mubr.bf16.mxu0 0
        %1197 = vmatmul.mubr.bf16.gmra.mxu0 %v1162
        %v1198 = vpop.f32.mrf.mxu0
        %v1199 = vadd.f32 %v1147, %v1198
        %v1200 = vpop.f32.mrf.mxu0
        %v1201 = vpop.f32.mrf.mxu0
        %v1202 = vpop.f32.mrf.mxu0
        %1203 = vdwg.mxu0
        %v1204 = vmax.f32 %v1199, 0.0
        %v1205 = vpack.c.bf16 %v1204, %v1204
        %s1206 = scalar_lea.vmem %s5, 32
        %v1207 = vld [vmem:[%s1206] sm:$0xf]
        %v1208 = vld [vmem:[%s1206 + $0x4] sm:$0xf]
        %v1209 = vld [vmem:[%s1206 + $0x8] sm:$0xf]
        %v1210 = vld [vmem:[%s1206 + $0xc] sm:$0xf]
        %v1211 = vld [vmem:[%s1206 + $0x10] sm:$0xf]
        %v1212 = vld [vmem:[%s1206 + $0x14] sm:$0xf]
        %v1213 = vld [vmem:[%s1206 + $0x18] sm:$0xf]
        %v1214 = vld [vmem:[%s1206 + $0x1c] sm:$0xf]
        %v1215 = vld [vmem:[%s812 + $0x7] sm:$0x1]
        %v1216 = vlaneseq
        %v1217 = vshrl.u32 %v1216, 7
        %v1218 = vsub.s32 0, %v1217
        %v1219 = vrot.slane %v1215, %v1218
        %v1228 = vunpack.c.l.b16 %v1207
        %v1229 = vunpack.c.l.b16 %v1208
        %v1230 = vunpack.c.l.b16 %v1209
        %v1231 = vunpack.c.l.b16 %v1210
        %v1232 = vunpack.c.l.b16 %v1211
        %v1233 = vunpack.c.l.b16 %v1212
        %v1234 = vunpack.c.l.b16 %v1213
        %v1235 = vunpack.c.l.b16 %v1214
        %v1236 = vpack.c.b16 %v1229, %v1228
        %v1237 = vpack.c.b16 %v1231, %v1230
        %v1238 = vpack.c.b16 %v1233, %v1232
        %v1239 = vpack.c.b16 %v1235, %v1234
        %v1245 = vsel %vm741, %v1205, 0
        %1247 = vmatprep.subr.bf16.mxu0 0
        %1248 = vmatpush1.bf16.msra.mxu0 0
        %1249 = vmatprep.subr.bf16.mxu0 0
        %1250 = vmatpush1.bf16.msra.mxu0 0
        %1251 = vmatprep.subr.bf16.mxu0 0
        %1252 = vmatpush1.bf16.msra.mxu0 0
        %1253 = vmatprep.subr.bf16.mxu0 0
        %1254 = vmatpush1.bf16.msra.mxu0 0
        %1255 = vmatprep.subr.bf16.mxu0 0
        %1256 = vmatpush1.bf16.msra.mxu0 %v1239
        %1257 = vmatprep.subr.bf16.mxu0 0
        %1258 = vmatpush1.bf16.msra.mxu0 %v1238
        %1259 = vmatprep.subr.bf16.mxu0 0
        %1260 = vmatpush1.bf16.msra.mxu0 %v1237
        %1261 = vmatprep.subr.bf16.mxu0 0
        %1262 = vmatpush1.bf16.msra.mxu0 %v1236
        %1263 = vmatprep.subr.bf16.mxu0 0
        %1264 = vmatpush2.bf16.msra.mxu0 0
        %1265 = vmatprep.subr.bf16.mxu0 0
        %1266 = vmatpush2.bf16.msra.mxu0 0
        %1267 = vmatprep.subr.bf16.mxu0 0
        %1268 = vmatpush2.bf16.msra.mxu0 0
        %1269 = vmatprep.subr.bf16.mxu0 0
        %1270 = vmatpush2.bf16.msra.mxu0 0
        %1271 = vmatprep.subr.bf16.mxu0 0
        %1272 = vmatpush2.bf16.msra.mxu0 0
        %1273 = vmatprep.subr.bf16.mxu0 0
        %1274 = vmatpush2.bf16.msra.mxu0 0
        %1275 = vmatprep.subr.bf16.mxu0 0
        %1276 = vmatpush2.bf16.msra.mxu0 0
        %1277 = vmatprep.subr.bf16.mxu0 0
        %1278 = vmatpush2.bf16.msra.mxu0 0
        %1279 = vmatprep.mubr.bf16.mxu0 0
        %1280 = vmatmul.mubr.bf16.gmra.mxu0 %v1245
        %v1281 = vpop.f32.mrf.mxu0
        %v1282 = vadd.f32 %v1219, %v1281
        %v1283 = vpop.f32.mrf.mxu0
        %v1284 = vpop.f32.mrf.mxu0
        %v1285 = vpop.f32.mrf.mxu0
        %1286 = vdwg.mxu0
        %v1287 = vadd.f32 %v1134, %v1282
        %v1288 = vld [vmem:[%s812 + $0x5] sm:$0x1]
        %v1289 = vld [vmem:[%s812 + $0x6] sm:$0x1]
        %v1290 = vsel %vm333, %v1287, 0.0
        %1291 = vadd.xlane.f32.xlu0 %v1290
        %v1292 = vpop.xlane.xlu0 %1291
        %v1293 = vmul.f32 %v1292, %v614
        %v1294 = vsub.f32 %v1287, %v1293
        %v1295 = vmul.f32 %v1294, %v1294
        %v1296 = vsel %vm333, %v1295, 0.0
        %1297 = vadd.xlane.f32.xlu0 %v1296
        %v1298 = vpop.xlane.xlu0 %1297
        %v1299 = vmul.f32 %v1298, %v614
        %v1300 = vadd.f32 %v1299, 1e-05
        %v1301 = vrsqrt.pop %v1300
        %v1302 = vmul.f32 %v1294, %v1301
        %v1303 = vlaneseq
        %v1304 = vshrl.u32 %v1303, 7
        %v1305 = vsub.s32 0, %v1304
        %v1306 = vrot.slane %v1288, %v1305
        %v1307 = vmul.f32 %v1302, %v1306
        %v1308 = vlaneseq
        %v1309 = vshrl.u32 %v1308, 7
        %v1310 = vsub.s32 0, %v1309
        %v1311 = vrot.slane %v1289, %v1310
        %v1312 = vadd.f32 %v1307, %v1311
        %v1313 = vpack.c.bf16 %v1312, %v1312
        %v1314 = vld [vmem:[%s6] sm:$0xf]
        %v1315 = vld [vmem:[%s6 + $0x4] sm:$0xf]
        %v1316 = vld [vmem:[%s6 + $0x8] sm:$0xf]
        %v1317 = vld [vmem:[%s6 + $0xc] sm:$0xf]
        %v1318 = vld [vmem:[%s7] sm:$0x1]
        %v1320 = vlaneseq
        %v1321 = vshrl.u32 %v1320, 7
        %v1322 = vsub.s32 0, %v1321
        %v1323 = vrot.slane %v1318, %v1322
        %v1329 = vunpack.c.l.b16 %v1314
        %v1330 = vunpack.c.l.b16 %v1315
        %v1331 = vunpack.c.l.b16 %v1316
        %v1332 = vunpack.c.l.b16 %v1317
        %v1333 = vpack.c.b16 %v1330, %v1329
        %v1334 = vpack.c.b16 %v1332, %v1331
        %v1338 = vsel %vm333, %v1313, 0
        %1340 = vmatprep.subr.bf16.mxu0 0
        %1341 = vmatpush1.bf16.msra.mxu0 0
        %1342 = vmatprep.subr.bf16.mxu0 0
        %1343 = vmatpush1.bf16.msra.mxu0 0
        %1344 = vmatprep.subr.bf16.mxu0 0
        %1345 = vmatpush1.bf16.msra.mxu0 0
        %1346 = vmatprep.subr.bf16.mxu0 0
        %1347 = vmatpush1.bf16.msra.mxu0 0
        %1348 = vmatprep.subr.bf16.mxu0 0
        %1349 = vmatpush1.bf16.msra.mxu0 0
        %1350 = vmatprep.subr.bf16.mxu0 0
        %1351 = vmatpush1.bf16.msra.mxu0 0
        %1352 = vmatprep.subr.bf16.mxu0 0
        %1353 = vmatpush1.bf16.msra.mxu0 %v1334
        %1354 = vmatprep.subr.bf16.mxu0 0
        %1355 = vmatpush1.bf16.msra.mxu0 %v1333
        %1356 = vmatprep.subr.bf16.mxu0 0
        %1357 = vmatpush2.bf16.msra.mxu0 0
        %1358 = vmatprep.subr.bf16.mxu0 0
        %1359 = vmatpush2.bf16.msra.mxu0 0
        %1360 = vmatprep.subr.bf16.mxu0 0
        %1361 = vmatpush2.bf16.msra.mxu0 0
        %1362 = vmatprep.subr.bf16.mxu0 0
        %1363 = vmatpush2.bf16.msra.mxu0 0
        %1364 = vmatprep.subr.bf16.mxu0 0
        %1365 = vmatpush2.bf16.msra.mxu0 0
        %1366 = vmatprep.subr.bf16.mxu0 0
        %1367 = vmatpush2.bf16.msra.mxu0 0
        %1368 = vmatprep.subr.bf16.mxu0 0
        %1369 = vmatpush2.bf16.msra.mxu0 0
        %1370 = vmatprep.subr.bf16.mxu0 0
        %1371 = vmatpush2.bf16.msra.mxu0 0
        %1372 = vmatprep.mubr.bf16.mxu0 0
        %1373 = vmatmul.mubr.bf16.gmra.mxu0 %v1338
        %v1374 = vpop.f32.mrf.mxu0
        %v1375 = vadd.f32 %v1323, %v1374
        %v1376 = vpop.f32.mrf.mxu0
        %v1377 = vpop.f32.mrf.mxu0
        %v1378 = vpop.f32.mrf.mxu0
        %1379 = vdwg.mxu0
        %1380 = vst [vmem:[%s296] sm:$0xff] %v1375
        %s1381 = sand.u32 %s203, 1
        %s1382 = scalar_lea.sflag [#allocation3], %s1381
        %s1383 = sand.u32 %s203, 1
        %s1384 = smul.addr %s1383, 8
        %s1385 = scalar_lea.vmem [#allocation2], %s1384
        // Predicated region
        $region53: #{transformer_forward.1} parent=51 // pred_check
          %p1386 = pneg %p213
        $region54: #{transformer_forward.1} parent=51 // pred_check_branch
          %1388 = sbr.rel (%p1386) target = $region56
        $region55: #{transformer_forward.1} parent=51 // pred_region
          %s1390 = ssub.s32 128, 128
          %1391 = vsyncadd %s1382, %s1390
          %s1392 = smul.addr %s22, 128
          %s1393 = scalar_lea.hbm %s8, %s1392
          %s1395 = sshll.u32 %s1385, 4
          %s1396 = int_to_ptr.vmem [resolvable:$true] %s1395
          %1398 = dma.vmem_to_hbm [thread:$0]  %s1396, 128, %s1393, %s1382
        $region56: #{transformer_forward.1} parent=51 // pred_fallthru
          _
      $region52: #{transformer_forward.1} parent=5 // pred_fallthru
        _
      %p1399 = scmp.le.s32.totalorder 2, %s17
      // Predicated region
      $region57: #{transformer_forward.1} parent=5 // pred_check
        %p1400 = pneg %p1399
      $region58: #{transformer_forward.1} parent=5 // pred_check_branch
        %1402 = sbr.rel (%p1400) target = $region60
      $region59: #{transformer_forward.1} parent=5 // pred_region
        %s1403 = ssub.s32 %s17, 2
        // Predicated region
        $region61: #{transformer_forward.1} parent=59 // pred_check
          %p1404 = pneg %p219
        $region62: #{transformer_forward.1} parent=59 // pred_check_branch
          %1406 = sbr.rel (%p1404) target = $region64
        $region63: #{transformer_forward.1} parent=59 // pred_region
          %s1407 = sand.u32 %s204, 1
          %s1408 = scalar_lea.sflag [#allocation3], %s1407
          %s1409 = sand.u32 %s204, 1
          %s1410 = smul.addr %s1409, 8
          %s1411 = scalar_lea.vmem [#allocation2], %s1410
          %1412 = dma.done %s1408, 128
        $region64: #{transformer_forward.1} parent=59 // pred_fallthru
          _
      $region60: #{transformer_forward.1} parent=5 // pred_fallthru
        _
    $region6: #{transformer_forward.1} parent=1 // loop_footer
      %s21 = sadd.s32 1, %s17
    $region7: #{transformer_forward.1} parent=1 // loop_footer_branch
      %16 = sbr.rel target = $region3
    $region8: #{transformer_forward.1} parent=1 // loop_exit
      _
    %1413 = vsyncpa [#allocation3], 1
    %s1414 = scalar_lea.sflag [#allocation3], 1
    %1415 = vsyncpa %s1414, 1

</llo_original>
